<compile_context>
chip_gen: v6e
topology: v6e:2x2x1
jax: 0.10.0
libtpu: 0.0.40
codegen_flags: <defaults>
</compile_context>

<pallas_src>
import math
import numpy as np
import jax
import jax.numpy as jnp
from jax.experimental import pallas as pl
from jax.experimental.pallas import tpu as pltpu

MXU_DTYPE = jnp.float32   # bf16 on v6e/v7x for bandwidth; f32 accum is kept.


def _round_up(x, m):
    return (x + m - 1) // m * m


def _mm(a, b, dims):
    """dot_general with MXU-input dtype control and f32 accumulation."""
    return jax.lax.dot_general(
        a.astype(MXU_DTYPE), b.astype(MXU_DTYPE), (dims, ((), ())),
        preferred_element_type=jnp.float32)


def make_fusion_kernel(n_experts, out_len, num_heads, batch_tile):
    N, E, H, TB = n_experts, out_len, num_heads, batch_tile

    def kernel(xf_ref, g_ref, wbd_ref, bbd_ref, rep_ref, seg_ref, pmap_ref,
               wo_ref, bo_ref, w1a_ref, w1b_ref, b1_ref, w2_ref, b2_ref,
               rw_ref, out_ref):
        xf = xf_ref[...].astype(jnp.float32)          # [TB, N*E] lane-dense input
        g = g_ref[...].astype(jnp.float32)            # [TB, N]

        # ---- gate-weighted sum over experts (VPU, unrolled over small N) ----
        weighted = xf[:, 0:E] * g[:, 0:1]
        for n in range(1, N):
            weighted = weighted + xf[:, n * E:(n + 1) * E] * g[:, n:n + 1]

        # ---- fused block-diagonal QKV projection: one MXU matmul, M = TB ----
        # (softmax scale is pre-folded into the Q block weights / bias)
        qkv = _mm(xf, wbd_ref[...], ((1,), (0,))) + bbd_ref[...]   # [TB, 3*N*E]
        q2 = qkv[:, 0:N * E]
        k2 = qkv[:, N * E:2 * N * E]
        v2 = qkv[:, 2 * N * E:3 * N * E]

        # ---- scores for all heads / query positions, per key position m ----
        rep = rep_ref[...]                            # [E, N*E] lane-replication
        seg = seg_ref[...]                            # [N*E, N*H] head segment-sum
        s = []
        for m in range(N):                            # small static loop over keys
            km_rep = _mm(k2[:, m * E:(m + 1) * E], rep, ((1,), (0,)))   # [TB, N*E]
            s.append(_mm(q2 * km_rep, seg, ((1,), (0,))))               # [TB, N*H]

        # ---- softmax over the key axis (elementwise across the N arrays) ----
        mx = s[0]
        for m in range(1, N):
            mx = jnp.maximum(mx, s[m])
        ex = [jnp.exp(sm - mx) for sm in s]
        denom = ex[0]
        for m in range(1, N):
            denom = denom + ex[m]
        inv = pl.reciprocal(denom, approx=True)       # EUP slot, nearly free

        # ---- PV with mean over query positions folded in (1/N baked in pmap) ----
        pmap = pmap_ref[...]                          # [N*H, E]
        attended_pre = None
        for m in range(N):
            wgt = _mm(ex[m] * inv, pmap, ((1,), (0,)))                  # [TB, E]
            term = wgt * v2[:, m * E:(m + 1) * E]
            attended_pre = term if attended_pre is None else attended_pre + term

        # ---- out projection (expert mean already folded; M = TB) ----
        attended = _mm(attended_pre, wo_ref[...], ((1,), (1,))) + bo_ref[...]

        # ---- transform MLP on concat([weighted, attended]) via split w1 ----
        h1 = (_mm(weighted, w1a_ref[...], ((1,), (1,)))
              + _mm(attended, w1b_ref[...], ((1,), (1,)))
              + b1_ref[...])                                            # [TB, HID]
        h1 = jnp.maximum(h1, 0.0)                                       # ReLU
        trans = _mm(h1, w2_ref[...], ((1,), (1,))) + b2_ref[...]        # [TB, E]

        rw = rw_ref[0, 0]                                               # SMEM scalar
        out_ref[...] = (weighted + rw * trans).astype(out_ref.dtype)

    return kernel


def _prep_params(params, n_experts, out_len, num_heads):
    """Static (per-weights) preprocessing: block-diagonal QKV, scale folding,
    attention helper constants, split MLP weights. Exact algebra, done once."""
    N, E, H = n_experts, out_len, num_heads
    D = E // H
    scale = 1.0 / math.sqrt(D)
    f32 = jnp.float32

    wqkv = params['wqkv'].astype(f32)
    bqkv = params['bqkv'].reshape(-1).astype(f32)
    w_parts = [wqkv[0:E] * scale, wqkv[E:2 * E], wqkv[2 * E:3 * E]]
    b_parts = [bqkv[0:E] * scale, bqkv[E:2 * E], bqkv[2 * E:3 * E]]

    eye_n = jnp.eye(N, dtype=f32)
    wbd = jnp.concatenate([jnp.kron(eye_n, w.T) for w in w_parts], axis=1)  # [N*E, 3*N*E]
    bbd = jnp.concatenate([jnp.tile(b, N) for b in b_parts]).reshape(1, 3 * N * E)

    # Lane replication: km [TB,E] @ rep -> [TB, N*E] with km repeated per query.
    rep = jnp.tile(jnp.eye(E, dtype=f32), (1, N))                        # [E, N*E]
    # Segment sum over the D channels of each (query, head) pair.
    j = jnp.arange(N * E)
    seg = (j[:, None] // D == jnp.arange(N * H)[None, :]).astype(f32)    # [N*E, N*H]
    # Sum over query positions (mean: 1/N baked in) + head -> channel broadcast.
    gidx = jnp.arange(N * H)
    eidx = jnp.arange(E)
    pmap = ((gidx[:, None] % H) == (eidx[None, :] // D)).astype(f32) / N  # [N*H, E]

    w1 = params['w1'].astype(f32)
    return dict(
        wbd=wbd, bbd=bbd, rep=rep, seg=seg, pmap=pmap,
        wo=params['wo'].astype(f32), bo=params['bo'].astype(f32),
        w1a=w1[:, 0:E], w1b=w1[:, E:2 * E], b1=params['b1'].astype(f32),
        w2=params['w2'].astype(f32), b2=params['b2'].astype(f32),
        rw=params['rw'].reshape(1, 1).astype(f32))


def expert_fusion_forward(x, g, params, num_heads):
    B, N, E = x.shape
    HID = params['w1'].shape[0]
    prep = _prep_params(params, N, E, num_heads)

    # Lane-dense activation slab: [B, N*E] (pure row-major reshape).
    xf = x.reshape(B, N * E).astype(jnp.float32)
    gf = g.astype(jnp.float32)

    # Batch tile: large tiles to amortize per-step overhead; >= 2 grid steps for
    # larger batches so both v7x TensorCores are used. Pad batch (zeros are
    # finite through the whole kernel) and slice the padding off afterwards.
    if B <= 128:
        TB = _round_up(B, 8)
    else:
        TB = min(256, _round_up((B + 1) // 2, 64))
    Bp = _round_up(B, TB)
    if Bp != B:
        xf = jnp.pad(xf, ((0, Bp - B), (0, 0)))
        gf = jnp.pad(gf, ((0, Bp - B), (0, 0)))
    grid = (Bp // TB,)

    kernel = make_fusion_kernel(N, E, num_heads, TB)

    def resident(a):
        # Weights / constants: full-array block, constant index_map -> stay in VMEM.
        return pl.BlockSpec(a.shape, lambda b: (0,) * a.ndim)

    weight_order = ('wbd', 'bbd', 'rep', 'seg', 'pmap', 'wo', 'bo',
                    'w1a', 'w1b', 'b1', 'w2', 'b2')
    weights = [prep[k] for k in weight_order]

    in_specs = ([pl.BlockSpec((TB, N * E), lambda b: (b, 0)),     # x tiled on batch
                 pl.BlockSpec((TB, N), lambda b: (b, 0))]          # gates tiled on batch
                + [resident(w) for w in weights]
                + [pl.BlockSpec(memory_space=pltpu.MemorySpace.SMEM)])   # rw scalar
    out_spec = pl.BlockSpec((TB, E), lambda b: (b, 0))

    # Advisory cost estimate for XLA scheduling around this small custom call.
    NH = num_heads * N
    flops = int(Bp * (2 * (N * E) * 3 * (N * E)                    # block-diag QKV
                      + N * (2 * E * (N * E) + (N * E) + 2 * (N * E) * NH)  # scores
                      + N * (2 * NH * E + 2 * E)                   # PV + accumulate
                      + 2 * E * E                                  # out projection
                      + 2 * E * HID * 2 + 2 * HID * E))            # MLP
    transcendentals = int(Bp * (N * NH + NH))
    bytes_accessed = int(4 * (xf.size + gf.size + Bp * E
                              + sum(int(np.prod(w.shape)) for w in weights)))

    out = pl.pallas_call(
        kernel,
        out_shape=jax.ShapeDtypeStruct((Bp, E), x.dtype),
        grid=grid,
        in_specs=in_specs,
        out_specs=out_spec,
        compiler_params=pltpu.CompilerParams(
            dimension_semantics=("parallel",)),
        cost_estimate=pl.CostEstimate(flops=flops,
                                      transcendentals=transcendentals,
                                      bytes_accessed=bytes_accessed),
    )(xf, gf, *weights, prep['rw'])
    return out[:B]


def reference_forward(x, g, params, num_heads):
    """Pure-JAX reference mirroring PyTorch nn.MultiheadAttention (eval mode)."""
    B, N, E = x.shape
    hd = E // num_heads
    weighted = jnp.sum(x * g[:, :, None], axis=1)
    wqkv, bqkv = params['wqkv'], params['bqkv'][0]
    q = x @ wqkv[0:E].T + bqkv[0:E]
    k = x @ wqkv[E:2 * E].T + bqkv[E:2 * E]
    v = x @ wqkv[2 * E:].T + bqkv[2 * E:]

    def split(t):
        return t.reshape(B, N, num_heads, hd).transpose(0, 2, 1, 3)

    qh, kh, vh = split(q), split(k), split(v)
    s = jnp.einsum('bhnd,bhmd->bhnm', qh, kh) / math.sqrt(hd)
    p = jax.nn.softmax(s, axis=-1)
    oh = jnp.einsum('bhnm,bhmd->bhnd', p, vh)
    o = oh.transpose(0, 2, 1, 3).reshape(B, N, E)
    attn_out = o @ params['wo'].T + params['bo'][0]
    attended = attn_out.mean(axis=1)
    comb = jnp.concatenate([weighted, attended], axis=1)
    h1 = jax.nn.relu(comb @ params['w1'].T + params['b1'][0])
    tr = h1 @ params['w2'].T + params['b2'][0]
    return weighted + params['rw'][0, 0] * tr


if __name__ == "__main__":
    # Small shapes consistent with the module:
    B, N_EXPERTS, OUT_LEN, HIDDEN = 2, 4, 16, 32
    num_heads = 4 if OUT_LEN % 4 == 0 else 2 if OUT_LEN % 2 == 0 else 1

    key = jax.random.PRNGKey(0)
    ks = jax.random.split(key, 12)

    def rnd(k, shape, scale=0.1):
        return (scale * jax.random.normal(k, shape)).astype(jnp.float32)

    params = {
        'wqkv': rnd(ks[0], (3 * OUT_LEN, OUT_LEN)),       # MHA in_proj_weight
        'bqkv': rnd(ks[1], (1, 3 * OUT_LEN)),             # MHA in_proj_bias
        'wo':   rnd(ks[2], (OUT_LEN, OUT_LEN)),           # MHA out_proj.weight
        'bo':   rnd(ks[3], (1, OUT_LEN)),                 # MHA out_proj.bias
        'w1':   rnd(ks[4], (HIDDEN, 2 * OUT_LEN)),        # transform[0].weight
        'b1':   rnd(ks[5], (1, HIDDEN)),                  # transform[0].bias
        'w2':   rnd(ks[6], (OUT_LEN, HIDDEN)),            # transform[3].weight
        'b2':   rnd(ks[7], (1, OUT_LEN)),                 # transform[3].bias
        'rw':   jnp.full((1, 1), 0.1, dtype=jnp.float32), # residual_weight
    }

    expert_outputs = jax.random.normal(ks[8], (B, N_EXPERTS, OUT_LEN), jnp.float32)
    gate_logits = jax.random.normal(ks[9], (B, N_EXPERTS), jnp.float32)
    gate_weights = jax.nn.softmax(gate_logits, axis=-1)

    out = expert_fusion_forward(expert_outputs, gate_weights, params, num_heads)
    out = jax.block_until_ready(out)

    ref = reference_forward(expert_outputs, gate_weights, params, num_heads)
    ref = jax.block_until_ready(ref)

    # Tolerance slightly relaxed vs. exact division: the softmax denominator
    # uses the EUP approximate reciprocal.
    np.testing.assert_allclose(np.asarray(out), np.asarray(ref),
                               rtol=2e-3, atol=2e-3)
    print("KERNEL_OK")
</pallas_src>

<mosaic_0001>
module attributes {stable_mosaic.version = 11 : i64} {
  func.func @kernel(%arg0: i32, %arg1: memref<8x64xf32, #tpu.memory_space<vmem>>, %arg2: memref<8x4xf32, #tpu.memory_space<vmem>>, %arg3: memref<64x192xf32, #tpu.memory_space<vmem>>, %arg4: memref<1x192xf32, #tpu.memory_space<vmem>>, %arg5: memref<16x64xf32, #tpu.memory_space<vmem>>, %arg6: memref<64x16xf32, #tpu.memory_space<vmem>>, %arg7: memref<16x16xf32, #tpu.memory_space<vmem>>, %arg8: memref<16x16xf32, #tpu.memory_space<vmem>>, %arg9: memref<1x16xf32, #tpu.memory_space<vmem>>, %arg10: memref<32x16xf32, #tpu.memory_space<vmem>>, %arg11: memref<32x16xf32, #tpu.memory_space<vmem>>, %arg12: memref<1x32xf32, #tpu.memory_space<vmem>>, %arg13: memref<16x32xf32, #tpu.memory_space<vmem>>, %arg14: memref<1x16xf32, #tpu.memory_space<vmem>>, %arg15: memref<1x1xf32, #tpu.memory_space<smem>>, %arg16: memref<8x16xf32, #tpu.memory_space<vmem>>) attributes {dimension_semantics = [#tpu.dimension_semantics<parallel>], iteration_bounds = array<i64: 1>, scalar_prefetch = 0 : i64, scratch_operands = 0 : i64, tpu.core_type = #tpu.core_type<tc>, window_params = [{transform_indices = @transform_0, window_bounds = array<i64: 8, 64>}, {transform_indices = @transform_1, window_bounds = array<i64: 8, 4>}, {pipeline_mode = #tpu.pipeline_mode<synchronous>, transform_indices = @transform_2, window_bounds = array<i64: 64, 192>}, {pipeline_mode = #tpu.pipeline_mode<synchronous>, transform_indices = @transform_3, window_bounds = array<i64: 1, 192>}, {pipeline_mode = #tpu.pipeline_mode<synchronous>, transform_indices = @transform_4, window_bounds = array<i64: 16, 64>}, {pipeline_mode = #tpu.pipeline_mode<synchronous>, transform_indices = @transform_5, window_bounds = array<i64: 64, 16>}, {pipeline_mode = #tpu.pipeline_mode<synchronous>, transform_indices = @transform_6, window_bounds = array<i64: 16, 16>}, {pipeline_mode = #tpu.pipeline_mode<synchronous>, transform_indices = @transform_7, window_bounds = array<i64: 16, 16>}, {pipeline_mode = #tpu.pipeline_mode<synchronous>, transform_indices = @transform_8, window_bounds = array<i64: 1, 16>}, {pipeline_mode = #tpu.pipeline_mode<synchronous>, transform_indices = @transform_9, window_bounds = array<i64: 32, 16>}, {pipeline_mode = #tpu.pipeline_mode<synchronous>, transform_indices = @transform_10, window_bounds = array<i64: 32, 16>}, {pipeline_mode = #tpu.pipeline_mode<synchronous>, transform_indices = @transform_11, window_bounds = array<i64: 1, 32>}, {pipeline_mode = #tpu.pipeline_mode<synchronous>, transform_indices = @transform_12, window_bounds = array<i64: 16, 32>}, {pipeline_mode = #tpu.pipeline_mode<synchronous>, transform_indices = @transform_13, window_bounds = array<i64: 1, 16>}, {transform_indices = @transform_14, window_bounds = array<i64: 1, 1>}, {transform_indices = @transform_15, window_bounds = array<i64: 8, 16>}]} {
    %c0 = arith.constant 0 : index
    %c0_0 = arith.constant 0 : index
    %0 = vector.load %arg1[%c0, %c0_0] : memref<8x64xf32, #tpu.memory_space<vmem>>, vector<8x64xf32>
    %c0_1 = arith.constant 0 : index
    %c0_2 = arith.constant 0 : index
    %1 = vector.load %arg2[%c0_1, %c0_2] : memref<8x4xf32, #tpu.memory_space<vmem>>, vector<8x4xf32>
    %2 = vector.extract_strided_slice %0 {offsets = [0, 0], sizes = [8, 16], strides = [1, 1]} : vector<8x64xf32> to vector<8x16xf32>
    %3 = vector.extract_strided_slice %1 {offsets = [0, 0], sizes = [8, 1], strides = [1, 1]} : vector<8x4xf32> to vector<8x1xf32>
    %4 = vector.broadcast %3 : vector<8x1xf32> to vector<8x16xf32>
    %5 = arith.mulf %2, %4 : vector<8x16xf32>
    %6 = vector.extract_strided_slice %0 {offsets = [0, 16], sizes = [8, 16], strides = [1, 1]} : vector<8x64xf32> to vector<8x16xf32>
    %7 = vector.extract_strided_slice %1 {offsets = [0, 1], sizes = [8, 1], strides = [1, 1]} : vector<8x4xf32> to vector<8x1xf32>
    %8 = vector.broadcast %7 : vector<8x1xf32> to vector<8x16xf32>
    %9 = arith.mulf %6, %8 : vector<8x16xf32>
    %10 = arith.addf %5, %9 : vector<8x16xf32>
    %11 = vector.extract_strided_slice %0 {offsets = [0, 32], sizes = [8, 16], strides = [1, 1]} : vector<8x64xf32> to vector<8x16xf32>
    %12 = vector.extract_strided_slice %1 {offsets = [0, 2], sizes = [8, 1], strides = [1, 1]} : vector<8x4xf32> to vector<8x1xf32>
    %13 = vector.broadcast %12 : vector<8x1xf32> to vector<8x16xf32>
    %14 = arith.mulf %11, %13 : vector<8x16xf32>
    %15 = arith.addf %10, %14 : vector<8x16xf32>
    %16 = vector.extract_strided_slice %0 {offsets = [0, 48], sizes = [8, 16], strides = [1, 1]} : vector<8x64xf32> to vector<8x16xf32>
    %17 = vector.extract_strided_slice %1 {offsets = [0, 3], sizes = [8, 1], strides = [1, 1]} : vector<8x4xf32> to vector<8x1xf32>
    %18 = vector.broadcast %17 : vector<8x1xf32> to vector<8x16xf32>
    %19 = arith.mulf %16, %18 : vector<8x16xf32>
    %20 = arith.addf %15, %19 : vector<8x16xf32>
    %c0_3 = arith.constant 0 : index
    %c0_4 = arith.constant 0 : index
    %21 = vector.load %arg3[%c0_3, %c0_4] : memref<64x192xf32, #tpu.memory_space<vmem>>, vector<64x192xf32>
    %cst = arith.constant dense<0.000000e+00> : vector<8x192xf32>
    %22 = tpu.matmul %0, %21, %cst {dimension_numbers = #tpu.dot_dimension_numbers<[1], [0], [0], [1], [0, 0, 1, 1], [], []>} : vector<8x64xf32>, vector<64x192xf32>, vector<8x192xf32> -> vector<8x192xf32>
    %c0_5 = arith.constant 0 : index
    %c0_6 = arith.constant 0 : index
    %23 = vector.load %arg4[%c0_5, %c0_6] : memref<1x192xf32, #tpu.memory_space<vmem>>, vector<1x192xf32>
    %24 = vector.broadcast %23 : vector<1x192xf32> to vector<8x192xf32>
    %25 = arith.addf %22, %24 : vector<8x192xf32>
    %26 = vector.extract_strided_slice %25 {offsets = [0, 0], sizes = [8, 64], strides = [1, 1]} : vector<8x192xf32> to vector<8x64xf32>
    %27 = vector.extract_strided_slice %25 {offsets = [0, 64], sizes = [8, 64], strides = [1, 1]} : vector<8x192xf32> to vector<8x64xf32>
    %28 = vector.extract_strided_slice %25 {offsets = [0, 128], sizes = [8, 64], strides = [1, 1]} : vector<8x192xf32> to vector<8x64xf32>
    %c0_7 = arith.constant 0 : index
    %c0_8 = arith.constant 0 : index
    %29 = vector.load %arg5[%c0_7, %c0_8] : memref<16x64xf32, #tpu.memory_space<vmem>>, vector<16x64xf32>
    %c0_9 = arith.constant 0 : index
    %c0_10 = arith.constant 0 : index
    %30 = vector.load %arg6[%c0_9, %c0_10] : memref<64x16xf32, #tpu.memory_space<vmem>>, vector<64x16xf32>
    %31 = vector.extract_strided_slice %27 {offsets = [0, 0], sizes = [8, 16], strides = [1, 1]} : vector<8x64xf32> to vector<8x16xf32>
    %cst_11 = arith.constant dense<0.000000e+00> : vector<8x64xf32>
    %32 = tpu.matmul %31, %29, %cst_11 {dimension_numbers = #tpu.dot_dimension_numbers<[1], [0], [0], [1], [0, 0, 1, 1], [], []>} : vector<8x16xf32>, vector<16x64xf32>, vector<8x64xf32> -> vector<8x64xf32>
    %33 = arith.mulf %26, %32 : vector<8x64xf32>
    %cst_12 = arith.constant dense<0.000000e+00> : vector<8x16xf32>
    %34 = tpu.matmul %33, %30, %cst_12 {dimension_numbers = #tpu.dot_dimension_numbers<[1], [0], [0], [1], [0, 0, 1, 1], [], []>} : vector<8x64xf32>, vector<64x16xf32>, vector<8x16xf32> -> vector<8x16xf32>
    %35 = vector.extract_strided_slice %27 {offsets = [0, 16], sizes = [8, 16], strides = [1, 1]} : vector<8x64xf32> to vector<8x16xf32>
    %cst_13 = arith.constant dense<0.000000e+00> : vector<8x64xf32>
    %36 = tpu.matmul %35, %29, %cst_13 {dimension_numbers = #tpu.dot_dimension_numbers<[1], [0], [0], [1], [0, 0, 1, 1], [], []>} : vector<8x16xf32>, vector<16x64xf32>, vector<8x64xf32> -> vector<8x64xf32>
    %37 = arith.mulf %26, %36 : vector<8x64xf32>
    %cst_14 = arith.constant dense<0.000000e+00> : vector<8x16xf32>
    %38 = tpu.matmul %37, %30, %cst_14 {dimension_numbers = #tpu.dot_dimension_numbers<[1], [0], [0], [1], [0, 0, 1, 1], [], []>} : vector<8x64xf32>, vector<64x16xf32>, vector<8x16xf32> -> vector<8x16xf32>
    %39 = vector.extract_strided_slice %27 {offsets = [0, 32], sizes = [8, 16], strides = [1, 1]} : vector<8x64xf32> to vector<8x16xf32>
    %cst_15 = arith.constant dense<0.000000e+00> : vector<8x64xf32>
    %40 = tpu.matmul %39, %29, %cst_15 {dimension_numbers = #tpu.dot_dimension_numbers<[1], [0], [0], [1], [0, 0, 1, 1], [], []>} : vector<8x16xf32>, vector<16x64xf32>, vector<8x64xf32> -> vector<8x64xf32>
    %41 = arith.mulf %26, %40 : vector<8x64xf32>
    %cst_16 = arith.constant dense<0.000000e+00> : vector<8x16xf32>
    %42 = tpu.matmul %41, %30, %cst_16 {dimension_numbers = #tpu.dot_dimension_numbers<[1], [0], [0], [1], [0, 0, 1, 1], [], []>} : vector<8x64xf32>, vector<64x16xf32>, vector<8x16xf32> -> vector<8x16xf32>
    %43 = vector.extract_strided_slice %27 {offsets = [0, 48], sizes = [8, 16], strides = [1, 1]} : vector<8x64xf32> to vector<8x16xf32>
    %cst_17 = arith.constant dense<0.000000e+00> : vector<8x64xf32>
    %44 = tpu.matmul %43, %29, %cst_17 {dimension_numbers = #tpu.dot_dimension_numbers<[1], [0], [0], [1], [0, 0, 1, 1], [], []>} : vector<8x16xf32>, vector<16x64xf32>, vector<8x64xf32> -> vector<8x64xf32>
    %45 = arith.mulf %26, %44 : vector<8x64xf32>
    %cst_18 = arith.constant dense<0.000000e+00> : vector<8x16xf32>
    %46 = tpu.matmul %45, %30, %cst_18 {dimension_numbers = #tpu.dot_dimension_numbers<[1], [0], [0], [1], [0, 0, 1, 1], [], []>} : vector<8x64xf32>, vector<64x16xf32>, vector<8x16xf32> -> vector<8x16xf32>
    %47 = arith.maximumf %34, %38 : vector<8x16xf32>
    %48 = arith.maximumf %47, %42 : vector<8x16xf32>
    %49 = arith.maximumf %48, %46 : vector<8x16xf32>
    %50 = arith.subf %34, %49 : vector<8x16xf32>
    %51 = math.exp %50 : vector<8x16xf32>
    %52 = arith.subf %38, %49 : vector<8x16xf32>
    %53 = math.exp %52 : vector<8x16xf32>
    %54 = arith.subf %42, %49 : vector<8x16xf32>
    %55 = math.exp %54 : vector<8x16xf32>
    %56 = arith.subf %46, %49 : vector<8x16xf32>
    %57 = math.exp %56 : vector<8x16xf32>
    %58 = arith.addf %51, %53 : vector<8x16xf32>
    %59 = arith.addf %58, %55 : vector<8x16xf32>
    %60 = arith.addf %59, %57 : vector<8x16xf32>
    %61 = tpu.reciprocal %60 {approx = true} : vector<8x16xf32> -> vector<8x16xf32>
    %c0_19 = arith.constant 0 : index
    %c0_20 = arith.constant 0 : index
    %62 = vector.load %arg7[%c0_19, %c0_20] : memref<16x16xf32, #tpu.memory_space<vmem>>, vector<16x16xf32>
    %63 = arith.mulf %51, %61 : vector<8x16xf32>
    %cst_21 = arith.constant dense<0.000000e+00> : vector<8x16xf32>
    %64 = tpu.matmul %63, %62, %cst_21 {dimension_numbers = #tpu.dot_dimension_numbers<[1], [0], [0], [1], [0, 0, 1, 1], [], []>} : vector<8x16xf32>, vector<16x16xf32>, vector<8x16xf32> -> vector<8x16xf32>
    %65 = vector.extract_strided_slice %28 {offsets = [0, 0], sizes = [8, 16], strides = [1, 1]} : vector<8x64xf32> to vector<8x16xf32>
    %66 = arith.mulf %64, %65 : vector<8x16xf32>
    %67 = arith.mulf %53, %61 : vector<8x16xf32>
    %cst_22 = arith.constant dense<0.000000e+00> : vector<8x16xf32>
    %68 = tpu.matmul %67, %62, %cst_22 {dimension_numbers = #tpu.dot_dimension_numbers<[1], [0], [0], [1], [0, 0, 1, 1], [], []>} : vector<8x16xf32>, vector<16x16xf32>, vector<8x16xf32> -> vector<8x16xf32>
    %69 = vector.extract_strided_slice %28 {offsets = [0, 16], sizes = [8, 16], strides = [1, 1]} : vector<8x64xf32> to vector<8x16xf32>
    %70 = arith.mulf %68, %69 : vector<8x16xf32>
    %71 = arith.addf %66, %70 : vector<8x16xf32>
    %72 = arith.mulf %55, %61 : vector<8x16xf32>
    %cst_23 = arith.constant dense<0.000000e+00> : vector<8x16xf32>
    %73 = tpu.matmul %72, %62, %cst_23 {dimension_numbers = #tpu.dot_dimension_numbers<[1], [0], [0], [1], [0, 0, 1, 1], [], []>} : vector<8x16xf32>, vector<16x16xf32>, vector<8x16xf32> -> vector<8x16xf32>
    %74 = vector.extract_strided_slice %28 {offsets = [0, 32], sizes = [8, 16], strides = [1, 1]} : vector<8x64xf32> to vector<8x16xf32>
    %75 = arith.mulf %73, %74 : vector<8x16xf32>
    %76 = arith.addf %71, %75 : vector<8x16xf32>
    %77 = arith.mulf %57, %61 : vector<8x16xf32>
    %cst_24 = arith.constant dense<0.000000e+00> : vector<8x16xf32>
    %78 = tpu.matmul %77, %62, %cst_24 {dimension_numbers = #tpu.dot_dimension_numbers<[1], [0], [0], [1], [0, 0, 1, 1], [], []>} : vector<8x16xf32>, vector<16x16xf32>, vector<8x16xf32> -> vector<8x16xf32>
    %79 = vector.extract_strided_slice %28 {offsets = [0, 48], sizes = [8, 16], strides = [1, 1]} : vector<8x64xf32> to vector<8x16xf32>
    %80 = arith.mulf %78, %79 : vector<8x16xf32>
    %81 = arith.addf %76, %80 : vector<8x16xf32>
    %c0_25 = arith.constant 0 : index
    %c0_26 = arith.constant 0 : index
    %82 = vector.load %arg8[%c0_25, %c0_26] : memref<16x16xf32, #tpu.memory_space<vmem>>, vector<16x16xf32>
    %cst_27 = arith.constant dense<0.000000e+00> : vector<8x16xf32>
    %83 = tpu.matmul %81, %82, %cst_27 {dimension_numbers = #tpu.dot_dimension_numbers<[1], [1], [0], [0], [0, 0, 1, 0], [], []>} : vector<8x16xf32>, vector<16x16xf32>, vector<8x16xf32> -> vector<8x16xf32>
    %c0_28 = arith.constant 0 : index
    %c0_29 = arith.constant 0 : index
    %84 = vector.load %arg9[%c0_28, %c0_29] : memref<1x16xf32, #tpu.memory_space<vmem>>, vector<1x16xf32>
    %85 = vector.broadcast %84 : vector<1x16xf32> to vector<8x16xf32>
    %86 = arith.addf %83, %85 : vector<8x16xf32>
    %c0_30 = arith.constant 0 : index
    %c0_31 = arith.constant 0 : index
    %87 = vector.load %arg10[%c0_30, %c0_31] : memref<32x16xf32, #tpu.memory_space<vmem>>, vector<32x16xf32>
    %cst_32 = arith.constant dense<0.000000e+00> : vector<8x32xf32>
    %88 = tpu.matmul %20, %87, %cst_32 {dimension_numbers = #tpu.dot_dimension_numbers<[1], [1], [0], [0], [0, 0, 1, 0], [], []>} : vector<8x16xf32>, vector<32x16xf32>, vector<8x32xf32> -> vector<8x32xf32>
    %c0_33 = arith.constant 0 : index
    %c0_34 = arith.constant 0 : index
    %89 = vector.load %arg11[%c0_33, %c0_34] : memref<32x16xf32, #tpu.memory_space<vmem>>, vector<32x16xf32>
    %cst_35 = arith.constant dense<0.000000e+00> : vector<8x32xf32>
    %90 = tpu.matmul %86, %89, %cst_35 {dimension_numbers = #tpu.dot_dimension_numbers<[1], [1], [0], [0], [0, 0, 1, 0], [], []>} : vector<8x16xf32>, vector<32x16xf32>, vector<8x32xf32> -> vector<8x32xf32>
    %91 = arith.addf %88, %90 : vector<8x32xf32>
    %c0_36 = arith.constant 0 : index
    %c0_37 = arith.constant 0 : index
    %92 = vector.load %arg12[%c0_36, %c0_37] : memref<1x32xf32, #tpu.memory_space<vmem>>, vector<1x32xf32>
    %93 = vector.broadcast %92 : vector<1x32xf32> to vector<8x32xf32>
    %94 = arith.addf %91, %93 : vector<8x32xf32>
    %cst_38 = arith.constant 0.000000e+00 : f32
    %95 = vector.broadcast %cst_38 : f32 to vector<8x32xf32>
    %96 = arith.maximumf %94, %95 : vector<8x32xf32>
    %c0_39 = arith.constant 0 : index
    %c0_40 = arith.constant 0 : index
    %97 = vector.load %arg13[%c0_39, %c0_40] : memref<16x32xf32, #tpu.memory_space<vmem>>, vector<16x32xf32>
    %cst_41 = arith.constant dense<0.000000e+00> : vector<8x16xf32>
    %98 = tpu.matmul %96, %97, %cst_41 {dimension_numbers = #tpu.dot_dimension_numbers<[1], [1], [0], [0], [0, 0, 1, 0], [], []>} : vector<8x32xf32>, vector<16x32xf32>, vector<8x16xf32> -> vector<8x16xf32>
    %c0_42 = arith.constant 0 : index
    %c0_43 = arith.constant 0 : index
    %99 = vector.load %arg14[%c0_42, %c0_43] : memref<1x16xf32, #tpu.memory_space<vmem>>, vector<1x16xf32>
    %100 = vector.broadcast %99 : vector<1x16xf32> to vector<8x16xf32>
    %101 = arith.addf %98, %100 : vector<8x16xf32>
    %c0_44 = arith.constant 0 : index
    %c0_45 = arith.constant 0 : index
    %102 = memref.load %arg15[%c0_44, %c0_45] : memref<1x1xf32, #tpu.memory_space<smem>>
    %103 = vector.broadcast %102 : f32 to vector<8x16xf32>
    %104 = arith.mulf %103, %101 : vector<8x16xf32>
    %105 = arith.addf %20, %104 : vector<8x16xf32>
    %c0_46 = arith.constant 0 : index
    %c0_47 = arith.constant 0 : index
    %106 = vector.load %arg16[%c0_46, %c0_47] : memref<8x16xf32, #tpu.memory_space<vmem>>, vector<8x16xf32>
    tpu.vector_store %arg16[%c0_46, %c0_47], %105 {strides = array<i32>} : memref<8x16xf32, #tpu.memory_space<vmem>>, vector<8x16xf32>,
    return
  }
  func.func @transform_0(%arg0: i32) -> (i32, i32) {
    %c0_i32 = arith.constant 0 : i32
    %c0_i32_0 = arith.constant 0 : i32
    return %arg0, %c0_i32 : i32, i32
  }
  func.func @transform_1(%arg0: i32) -> (i32, i32) {
    %c0_i32 = arith.constant 0 : i32
    %c0_i32_0 = arith.constant 0 : i32
    return %arg0, %c0_i32 : i32, i32
  }
  func.func @transform_2(%arg0: i32) -> (i32, i32) {
    %c0_i32 = arith.constant 0 : i32
    %c0_i32_0 = arith.constant 0 : i32
    %c0_i32_1 = arith.constant 0 : i32
    return %c0_i32, %c0_i32_0 : i32, i32
  }
  func.func @transform_3(%arg0: i32) -> (i32, i32) {
    %c0_i32 = arith.constant 0 : i32
    %c0_i32_0 = arith.constant 0 : i32
    %c0_i32_1 = arith.constant 0 : i32
    return %c0_i32, %c0_i32_0 : i32, i32
  }
  func.func @transform_4(%arg0: i32) -> (i32, i32) {
    %c0_i32 = arith.constant 0 : i32
    %c0_i32_0 = arith.constant 0 : i32
    %c0_i32_1 = arith.constant 0 : i32
    return %c0_i32, %c0_i32_0 : i32, i32
  }
  func.func @transform_5(%arg0: i32) -> (i32, i32) {
    %c0_i32 = arith.constant 0 : i32
    %c0_i32_0 = arith.constant 0 : i32
    %c0_i32_1 = arith.constant 0 : i32
    return %c0_i32, %c0_i32_0 : i32, i32
  }
  func.func @transform_6(%arg0: i32) -> (i32, i32) {
    %c0_i32 = arith.constant 0 : i32
    %c0_i32_0 = arith.constant 0 : i32
    %c0_i32_1 = arith.constant 0 : i32
    return %c0_i32, %c0_i32_0 : i32, i32
  }
  func.func @transform_7(%arg0: i32) -> (i32, i32) {
    %c0_i32 = arith.constant 0 : i32
    %c0_i32_0 = arith.constant 0 : i32
    %c0_i32_1 = arith.constant 0 : i32
    return %c0_i32, %c0_i32_0 : i32, i32
  }
  func.func @transform_8(%arg0: i32) -> (i32, i32) {
    %c0_i32 = arith.constant 0 : i32
    %c0_i32_0 = arith.constant 0 : i32
    %c0_i32_1 = arith.constant 0 : i32
    return %c0_i32, %c0_i32_0 : i32, i32
  }
  func.func @transform_9(%arg0: i32) -> (i32, i32) {
    %c0_i32 = arith.constant 0 : i32
    %c0_i32_0 = arith.constant 0 : i32
    %c0_i32_1 = arith.constant 0 : i32
    return %c0_i32, %c0_i32_0 : i32, i32
  }
  func.func @transform_10(%arg0: i32) -> (i32, i32) {
    %c0_i32 = arith.constant 0 : i32
    %c0_i32_0 = arith.constant 0 : i32
    %c0_i32_1 = arith.constant 0 : i32
    return %c0_i32, %c0_i32_0 : i32, i32
  }
  func.func @transform_11(%arg0: i32) -> (i32, i32) {
    %c0_i32 = arith.constant 0 : i32
    %c0_i32_0 = arith.constant 0 : i32
    %c0_i32_1 = arith.constant 0 : i32
    return %c0_i32, %c0_i32_0 : i32, i32
  }
  func.func @transform_12(%arg0: i32) -> (i32, i32) {
    %c0_i32 = arith.constant 0 : i32
    %c0_i32_0 = arith.constant 0 : i32
    %c0_i32_1 = arith.constant 0 : i32
    return %c0_i32, %c0_i32_0 : i32, i32
  }
  func.func @transform_13(%arg0: i32) -> (i32, i32) {
    %c0_i32 = arith.constant 0 : i32
    %c0_i32_0 = arith.constant 0 : i32
    %c0_i32_1 = arith.constant 0 : i32
    return %c0_i32, %c0_i32_0 : i32, i32
  }
  func.func @transform_14(%arg0: i32) -> (i32, i32) {
    %c0_i32 = arith.constant 0 : i32
    %c0_i32_0 = arith.constant 0 : i32
    %c0_i32_1 = arith.constant 0 : i32
    return %c0_i32, %c0_i32_0 : i32, i32
  }
  func.func @transform_15(%arg0: i32) -> (i32, i32) {
    %c0_i32 = arith.constant 0 : i32
    %c0_i32_0 = arith.constant 0 : i32
    return %arg0, %c0_i32 : i32, i32
  }
}

</mosaic_0001>

<llo_original>
// kernel: tpu_custom_call.1
$region0: #{tpu_custom_call.1}
  #allocation0 [shape = 'u32[]', space=smem, size = 0x4, offset = 0x4, fixed_abs, tag = 'smem constant byte address 0x4 - core index']
  #allocation1 [shape = 'u32[144,128]{1,0:T(1,128)}', space=vmem, size = 0x12000, scoped, tag = 'internal scratch']
  #allocation2 [shape = 'f32[1,1]{1,0:T(1,128)S(6)}', space=smem, size = 0x200, scoped, tag = 'scoped memory for tpu_custom_call.1']
  %s0 = inlined_call_operand.hbm [shape: f32[8,64], index: 0, kind: input, shape index: {}]
  %s1 = inlined_call_operand.vmem [shape: f32[8,4], index: 1, kind: input, shape index: {}]
  %s2 = inlined_call_operand.vmem [shape: f32[64,192], index: 2, kind: input, shape index: {}]
  %s3 = inlined_call_operand.vmem [shape: f32[1,192], index: 3, kind: input, shape index: {}]
  %s4 = inlined_call_operand.vmem [shape: f32[16,64], index: 4, kind: input, shape index: {}]
  %s5 = inlined_call_operand.vmem [shape: f32[64,16], index: 5, kind: input, shape index: {}]
  %s6 = inlined_call_operand.hbm [shape: f32[16,16], index: 6, kind: input, shape index: {}]
  %s7 = inlined_call_operand.hbm [shape: f32[16,16], index: 7, kind: input, shape index: {}]
  %s8 = inlined_call_operand.hbm [shape: f32[1,16], index: 8, kind: input, shape index: {}]
  %s9 = inlined_call_operand.vmem [shape: f32[32,16], index: 9, kind: input, shape index: {}]
  %s10 = inlined_call_operand.vmem [shape: f32[32,16], index: 10, kind: input, shape index: {}]
  %s11 = inlined_call_operand.hbm [shape: f32[1,32], index: 11, kind: input, shape index: {}]
  %s12 = inlined_call_operand.vmem [shape: f32[16,32], index: 12, kind: input, shape index: {}]
  %s13 = inlined_call_operand.vmem [shape: f32[1,16], index: 13, kind: input, shape index: {}]
  %s14 = inlined_call_operand.<no memory space> [shape: f32[1,1], index: 14, kind: input, shape index: {}]
  %s15 = inlined_call_operand.hbm [shape: f32[8,16], index: 15, kind: output, shape index: {}]
  %s16 = sld [smem:[#allocation0]]
  $region90: #{tpu_custom_call.1} parent=0
    _
  %s18 = ssub.s32 1, %s16
  %s19 = scalar_select 0, %s18, %s16
  %20 = sst [smem:[#allocation2]] %s14
  $region1: #{tpu_custom_call.1} parent=0
    #allocation3 [shape = 'u8[4096]{0}', space=vmem, size = 0x1000, scoped, tag = 'input window, operand 0, single buffered']
    #allocation4 [shape = 's32[1]{0}', space=sflag, size = 0x4, scoped, tag = 'scoped memory for tpu_custom_call.1']
    #allocation5 [shape = 's32[1]{0}', space=sflag, size = 0x4, scoped, tag = 'scoped memory for tpu_custom_call.1']
    #allocation6 [shape = 'u8[8192]{0}', space=vmem, size = 0x2000, scoped, tag = 'input window, operand 6, single buffered']
    #allocation7 [shape = 's32[1]{0}', space=sflag, size = 0x4, scoped, tag = 'scoped memory for tpu_custom_call.1']
    #allocation8 [shape = 'u8[8192]{0}', space=vmem, size = 0x2000, scoped, tag = 'input window, operand 7, single buffered']
    #allocation9 [shape = 'u8[512]{0}', space=vmem, size = 0x400, scoped, tag = 'input window, operand 8, single buffered']
    #allocation10 [shape = 's32[1]{0}', space=sflag, size = 0x4, scoped, tag = 'scoped memory for tpu_custom_call.1']
    #allocation11 [shape = 'u8[512]{0}', space=vmem, size = 0x400, scoped, tag = 'input window, operand 11, single buffered']
    #allocation12 [shape = 'u8[4096]{0}', space=vmem, size = 0x1000, scoped, tag = 'output window, operand 0, single buffered']
    %21 = vsyncpa [#allocation4], 0
    %22 = vsyncpa [#allocation7], 0
    %23 = vsyncpa [#allocation10], 0
    %24 = vsyncpa [#allocation5], 0
    // Predicated region
    $region2: #{tpu_custom_call.1} parent=1 // pred_check
      _
    $region3: #{tpu_custom_call.1} parent=1 // pred_check_branch
      %26 = sbr.rel (0) target = $region5
    $region4: #{tpu_custom_call.1} parent=1 // pred_region
      %s28 = ssub.s32 128, 128
      %29 = vsyncadd [#allocation4], %s28
      %s31 = sshll.u32 [#allocation3], 4
      %s32 = int_to_ptr.vmem [resolvable:$true] %s31
      %34 = dma.hbm_to_vmem [thread:$0]  %s0, 128, %s32, [#allocation4]
    $region5: #{tpu_custom_call.1} parent=1 // pred_fallthru
      _
    // Predicated region
    $region6: #{tpu_custom_call.1} parent=1 // pred_check
      _
    $region7: #{tpu_custom_call.1} parent=1 // pred_check_branch
      %36 = sbr.rel (0) target = $region9
    $region8: #{tpu_custom_call.1} parent=1 // pred_region
      _
    $region9: #{tpu_custom_call.1} parent=1 // pred_fallthru
      _
    // Predicated region
    $region10: #{tpu_custom_call.1} parent=1 // pred_check
      _
    $region11: #{tpu_custom_call.1} parent=1 // pred_check_branch
      %38 = sbr.rel (0) target = $region13
    $region12: #{tpu_custom_call.1} parent=1 // pred_region
      _
    $region13: #{tpu_custom_call.1} parent=1 // pred_fallthru
      _
    // Predicated region
    $region14: #{tpu_custom_call.1} parent=1 // pred_check
      _
    $region15: #{tpu_custom_call.1} parent=1 // pred_check_branch
      %40 = sbr.rel (0) target = $region17
    $region16: #{tpu_custom_call.1} parent=1 // pred_region
      _
    $region17: #{tpu_custom_call.1} parent=1 // pred_fallthru
      _
    // Predicated region
    $region18: #{tpu_custom_call.1} parent=1 // pred_check
      _
    $region19: #{tpu_custom_call.1} parent=1 // pred_check_branch
      %42 = sbr.rel (0) target = $region21
    $region20: #{tpu_custom_call.1} parent=1 // pred_region
      _
    $region21: #{tpu_custom_call.1} parent=1 // pred_fallthru
      _
    // Predicated region
    $region22: #{tpu_custom_call.1} parent=1 // pred_check
      _
    $region23: #{tpu_custom_call.1} parent=1 // pred_check_branch
      %44 = sbr.rel (0) target = $region25
    $region24: #{tpu_custom_call.1} parent=1 // pred_region
      _
    $region25: #{tpu_custom_call.1} parent=1 // pred_fallthru
      _
    // Predicated region
    $region26: #{tpu_custom_call.1} parent=1 // pred_check
      _
    $region27: #{tpu_custom_call.1} parent=1 // pred_check_branch
      %46 = sbr.rel (0) target = $region29
    $region28: #{tpu_custom_call.1} parent=1 // pred_region
      %s48 = ssub.s32 256, 256
      %49 = vsyncadd [#allocation7], %s48
      %s50 = sshll.u32 [#allocation6], 4
      %s51 = int_to_ptr.vmem [resolvable:$true] %s50
      %56 = dma.hbm_to_vmem [thread:$0]  %s6, 256, %s51, [#allocation7], 128, 128, 8
    $region29: #{tpu_custom_call.1} parent=1 // pred_fallthru
      _
    // Predicated region
    $region30: #{tpu_custom_call.1} parent=1 // pred_check
      _
    $region31: #{tpu_custom_call.1} parent=1 // pred_check_branch
      %58 = sbr.rel (0) target = $region33
    $region32: #{tpu_custom_call.1} parent=1 // pred_region
      %s60 = ssub.s32 256, 256
      %61 = vsyncadd [#allocation7], %s60
      %s62 = sshll.u32 [#allocation8], 4
      %s63 = int_to_ptr.vmem [resolvable:$true] %s62
      %68 = dma.hbm_to_vmem [thread:$0]  %s7, 256, %s63, [#allocation7], 128, 128, 8
    $region33: #{tpu_custom_call.1} parent=1 // pred_fallthru
      _
    // Predicated region
    $region34: #{tpu_custom_call.1} parent=1 // pred_check
      _
    $region35: #{tpu_custom_call.1} parent=1 // pred_check_branch
      %70 = sbr.rel (0) target = $region37
    $region36: #{tpu_custom_call.1} parent=1 // pred_region
      %s72 = ssub.s32 16, 16
      %73 = vsyncadd [#allocation10], %s72
      %s75 = sshll.u32 [#allocation9], 4
      %s76 = int_to_ptr.vmem [resolvable:$true] %s75
      %78 = dma.hbm_to_vmem [thread:$0]  %s8, 16, %s76, [#allocation10]
    $region37: #{tpu_custom_call.1} parent=1 // pred_fallthru
      _
    // Predicated region
    $region38: #{tpu_custom_call.1} parent=1 // pred_check
      _
    $region39: #{tpu_custom_call.1} parent=1 // pred_check_branch
      %80 = sbr.rel (0) target = $region41
    $region40: #{tpu_custom_call.1} parent=1 // pred_region
      _
    $region41: #{tpu_custom_call.1} parent=1 // pred_fallthru
      _
    // Predicated region
    $region42: #{tpu_custom_call.1} parent=1 // pred_check
      _
    $region43: #{tpu_custom_call.1} parent=1 // pred_check_branch
      %82 = sbr.rel (0) target = $region45
    $region44: #{tpu_custom_call.1} parent=1 // pred_region
      _
    $region45: #{tpu_custom_call.1} parent=1 // pred_fallthru
      _
    // Predicated region
    $region46: #{tpu_custom_call.1} parent=1 // pred_check
      _
    $region47: #{tpu_custom_call.1} parent=1 // pred_check_branch
      %84 = sbr.rel (0) target = $region49
    $region48: #{tpu_custom_call.1} parent=1 // pred_region
      %s86 = ssub.s32 16, 16
      %87 = vsyncadd [#allocation10], %s86
      %s89 = sshll.u32 [#allocation11], 4
      %s90 = int_to_ptr.vmem [resolvable:$true] %s89
      %92 = dma.hbm_to_vmem [thread:$0]  %s11, 16, %s90, [#allocation10]
    $region49: #{tpu_custom_call.1} parent=1 // pred_fallthru
      _
    // Predicated region
    $region50: #{tpu_custom_call.1} parent=1 // pred_check
      _
    $region51: #{tpu_custom_call.1} parent=1 // pred_check_branch
      %94 = sbr.rel (0) target = $region53
    $region52: #{tpu_custom_call.1} parent=1 // pred_region
      _
    $region53: #{tpu_custom_call.1} parent=1 // pred_fallthru
      _
    // Predicated region
    $region54: #{tpu_custom_call.1} parent=1 // pred_check
      _
    $region55: #{tpu_custom_call.1} parent=1 // pred_check_branch
      %96 = sbr.rel (0) target = $region57
    $region56: #{tpu_custom_call.1} parent=1 // pred_region
      _
    $region57: #{tpu_custom_call.1} parent=1 // pred_fallthru
      _
    // Predicated region
    $region58: #{tpu_custom_call.1} parent=1 // pred_check
      _
    $region59: #{tpu_custom_call.1} parent=1 // pred_check_branch
      %98 = sbr.rel (0) target = $region61
    $region60: #{tpu_custom_call.1} parent=1 // pred_region
      _
    $region61: #{tpu_custom_call.1} parent=1 // pred_fallthru
      _
    // Predicated region
    $region62: #{tpu_custom_call.1} parent=1 // pred_check
      _
    $region63: #{tpu_custom_call.1} parent=1 // pred_check_branch
      %100 = sbr.rel (0) target = $region65
    $region64: #{tpu_custom_call.1} parent=1 // pred_region
      %101 = dma.done [#allocation4], 128
    $region65: #{tpu_custom_call.1} parent=1 // pred_fallthru
      _
    // Predicated region
    $region66: #{tpu_custom_call.1} parent=1 // pred_check
      _
    $region67: #{tpu_custom_call.1} parent=1 // pred_check_branch
      %103 = sbr.rel (0) target = $region69
    $region68: #{tpu_custom_call.1} parent=1 // pred_region
      %104 = dma.done [#allocation7], 256
    $region69: #{tpu_custom_call.1} parent=1 // pred_fallthru
      _
    // Predicated region
    $region70: #{tpu_custom_call.1} parent=1 // pred_check
      _
    $region71: #{tpu_custom_call.1} parent=1 // pred_check_branch
      %106 = sbr.rel (0) target = $region73
    $region72: #{tpu_custom_call.1} parent=1 // pred_region
      %107 = dma.done [#allocation7], 256
    $region73: #{tpu_custom_call.1} parent=1 // pred_fallthru
      _
    // Predicated region
    $region74: #{tpu_custom_call.1} parent=1 // pred_check
      _
    $region75: #{tpu_custom_call.1} parent=1 // pred_check_branch
      %109 = sbr.rel (0) target = $region77
    $region76: #{tpu_custom_call.1} parent=1 // pred_region
      %110 = dma.done [#allocation10], 16
    $region77: #{tpu_custom_call.1} parent=1 // pred_fallthru
      _
    // Predicated region
    $region78: #{tpu_custom_call.1} parent=1 // pred_check
      _
    $region79: #{tpu_custom_call.1} parent=1 // pred_check_branch
      %112 = sbr.rel (0) target = $region81
    $region80: #{tpu_custom_call.1} parent=1 // pred_region
      %113 = dma.done [#allocation10], 16
    $region81: #{tpu_custom_call.1} parent=1 // pred_fallthru
      _
    %v114 = vld [vmem:[#allocation3] sm:$0xff]
    %v115 = vld [vmem:[%s1] sm:$0xff]
    %117 = vset.pattern.permute.xlu0 0
    %118 = vperm.xlu0 %117, %v115
    %v119 = vpop.permute.xlu0 %118
    %v121 = vmul.f32 %v114, %v119
    %122 = vset.pattern.permute.xlu0 1
    %123 = vperm.xlu0 %122, %v115
    %v124 = vpop.permute.xlu0 %123
    %v126 = vmul.f32 %v114, %v124
    %128 = vrot.lane.b32.xlu0 %v126, 112
    %v129 = vpop.permute.xlu0 %128
    %v131 = vadd.f32 %v121, %v129
    %132 = vset.pattern.permute.xlu0 2
    %133 = vperm.xlu0 %132, %v115
    %v134 = vpop.permute.xlu0 %133
    %v136 = vmul.f32 %v114, %v134
    %138 = vrot.lane.b32.xlu0 %v136, 96
    %v139 = vpop.permute.xlu0 %138
    %v141 = vadd.f32 %v131, %v139
    %142 = vset.pattern.permute.xlu0 3
    %143 = vperm.xlu0 %142, %v115
    %v144 = vpop.permute.xlu0 %143
    %v146 = vmul.f32 %v114, %v144
    %148 = vrot.lane.b32.xlu0 %v146, 80
    %v149 = vpop.permute.xlu0 %148
    %v151 = vadd.f32 %v141, %v149
    %v152 = vld [vmem:[%s2] sm:$0xff]
    %v153 = vld [vmem:[%s2 + $0x8] sm:$0xff]
    %v154 = vld [vmem:[%s2 + $0x10] sm:$0xff]
    %v155 = vld [vmem:[%s2 + $0x18] sm:$0xff]
    %v156 = vld [vmem:[%s2 + $0x20] sm:$0xff]
    %v157 = vld [vmem:[%s2 + $0x28] sm:$0xff]
    %v158 = vld [vmem:[%s2 + $0x30] sm:$0xff]
    %v159 = vld [vmem:[%s2 + $0x38] sm:$0xff]
    %v160 = vld [vmem:[%s2 + $0x40] sm:$0xff]
    %v161 = vld [vmem:[%s2 + $0x48] sm:$0xff]
    %v162 = vld [vmem:[%s2 + $0x50] sm:$0xff]
    %v163 = vld [vmem:[%s2 + $0x58] sm:$0xff]
    %v164 = vld [vmem:[%s2 + $0x60] sm:$0xff]
    %v165 = vld [vmem:[%s2 + $0x68] sm:$0xff]
    %v166 = vld [vmem:[%s2 + $0x70] sm:$0xff]
    %v167 = vld [vmem:[%s2 + $0x78] sm:$0xff]
    %v168 = vld [vmem:[%s3] sm:$0x3]
    %v170 = vlaneseq
    %v171 = vshrl.u32 %v170, 7
    %v172 = vsub.s32 0, %v171
    %v173 = vrot.slane %v168, %v172
    %v174 = vlaneseq
    %v175 = vshrl.u32 %v174, 7
    %v176 = vsub.s32 1, %v175
    %v177 = vrot.slane %v168, %v176
    %vm180 = vcmask 523264
    %v182 = vsel %vm180, %v114, 0
    %184 = vmatprep.subr.mxu0 0.0
    %185 = vmatpush1.msra.mxu0 0.0
    %186 = vmatprep.subr.mxu0 0.0
    %187 = vmatpush1.msra.mxu0 0.0
    %188 = vmatprep.subr.mxu0 0.0
    %189 = vmatpush1.msra.mxu0 0.0
    %190 = vmatprep.subr.mxu0 0.0
    %191 = vmatpush1.msra.mxu0 0.0
    %192 = vmatprep.subr.mxu0 0.0
    %193 = vmatpush1.msra.mxu0 0.0
    %194 = vmatprep.subr.mxu0 0.0
    %195 = vmatpush1.msra.mxu0 0.0
    %196 = vmatprep.subr.mxu0 0.0
    %197 = vmatpush1.msra.mxu0 0.0
    %198 = vmatprep.subr.mxu0 0.0
    %199 = vmatpush1.msra.mxu0 0.0
    %200 = vmatprep.subr.mxu0 %v167
    %201 = vmatpush1.msra.mxu0 %v166
    %202 = vmatprep.subr.mxu0 %v165
    %203 = vmatpush1.msra.mxu0 %v164
    %204 = vmatprep.subr.mxu0 %v163
    %205 = vmatpush1.msra.mxu0 %v162
    %206 = vmatprep.subr.mxu0 %v161
    %207 = vmatpush1.msra.mxu0 %v160
    %208 = vmatprep.subr.mxu0 %v159
    %209 = vmatpush1.msra.mxu0 %v158
    %210 = vmatprep.subr.mxu0 %v157
    %211 = vmatpush1.msra.mxu0 %v156
    %212 = vmatprep.subr.mxu0 %v155
    %213 = vmatpush1.msra.mxu0 %v154
    %214 = vmatprep.subr.mxu0 %v153
    %215 = vmatpush1.msra.mxu0 %v152
    %216 = vmatprep.subr.mxu0 0.0
    %217 = vmatpush2.msra.mxu0 0.0
    %218 = vmatprep.subr.mxu0 0.0
    %219 = vmatpush2.msra.mxu0 0.0
    %220 = vmatprep.subr.mxu0 0.0
    %221 = vmatpush2.msra.mxu0 0.0
    %222 = vmatprep.subr.mxu0 0.0
    %223 = vmatpush2.msra.mxu0 0.0
    %224 = vmatprep.subr.mxu0 0.0
    %225 = vmatpush2.msra.mxu0 0.0
    %226 = vmatprep.subr.mxu0 0.0
    %227 = vmatpush2.msra.mxu0 0.0
    %228 = vmatprep.subr.mxu0 0.0
    %229 = vmatpush2.msra.mxu0 0.0
    %230 = vmatprep.subr.mxu0 0.0
    %231 = vmatpush2.msra.mxu0 0.0
    %232 = vmatprep.subr.mxu0 0.0
    %233 = vmatpush2.msra.mxu0 0.0
    %234 = vmatprep.subr.mxu0 0.0
    %235 = vmatpush2.msra.mxu0 0.0
    %236 = vmatprep.subr.mxu0 0.0
    %237 = vmatpush2.msra.mxu0 0.0
    %238 = vmatprep.subr.mxu0 0.0
    %239 = vmatpush2.msra.mxu0 0.0
    %240 = vmatprep.subr.mxu0 0.0
    %241 = vmatpush2.msra.mxu0 0.0
    %242 = vmatprep.subr.mxu0 0.0
    %243 = vmatpush2.msra.mxu0 0.0
    %244 = vmatprep.subr.mxu0 0.0
    %245 = vmatpush2.msra.mxu0 0.0
    %246 = vmatprep.subr.mxu0 0.0
    %247 = vmatpush2.msra.mxu0 0.0
    %248 = vmatprep.mubr.f32.mxu0 0.0
    %249 = vmatmul.mubr.f32.gmra.mxu0 %v182
    %v250 = vpop.f32.mrf.mxu0
    %v251 = vadd.f32 %v173, %v250
    %v252 = vpop.f32.mrf.mxu0
    %v253 = vadd.f32 %v177, %v252
    %254 = vdwg.mxu0
    %v255 = vld [vmem:[%s4] sm:$0xff]
    %v256 = vld [vmem:[%s4 + $0x8] sm:$0xff]
    %v257 = vld [vmem:[%s5] sm:$0xff]
    %v258 = vld [vmem:[%s5 + $0x8] sm:$0xff]
    %v259 = vld [vmem:[%s5 + $0x10] sm:$0xff]
    %v260 = vld [vmem:[%s5 + $0x18] sm:$0xff]
    %v261 = vld [vmem:[%s5 + $0x20] sm:$0xff]
    %v262 = vld [vmem:[%s5 + $0x28] sm:$0xff]
    %v263 = vld [vmem:[%s5 + $0x30] sm:$0xff]
    %v264 = vld [vmem:[%s5 + $0x38] sm:$0xff]
    %266 = vrot.lane.b32.xlu0 %v251, 64
    %v267 = vpop.permute.xlu0 %266
    %vm268 = vcmask 130048
    %v269 = vsel %vm268, %v267, 0
    %271 = vmatprep.subr.mxu0 0.0
    %272 = vmatpush1.msra.mxu0 0.0
    %273 = vmatprep.subr.mxu0 0.0
    %274 = vmatpush1.msra.mxu0 0.0
    %275 = vmatprep.subr.mxu0 0.0
    %276 = vmatpush1.msra.mxu0 0.0
    %277 = vmatprep.subr.mxu0 0.0
    %278 = vmatpush1.msra.mxu0 0.0
    %279 = vmatprep.subr.mxu0 0.0
    %280 = vmatpush1.msra.mxu0 0.0
    %281 = vmatprep.subr.mxu0 0.0
    %282 = vmatpush1.msra.mxu0 0.0
    %283 = vmatprep.subr.mxu0 0.0
    %284 = vmatpush1.msra.mxu0 0.0
    %285 = vmatprep.subr.mxu0 0.0
    %286 = vmatpush1.msra.mxu0 0.0
    %287 = vmatprep.subr.mxu0 0.0
    %288 = vmatpush1.msra.mxu0 0.0
    %289 = vmatprep.subr.mxu0 0.0
    %290 = vmatpush1.msra.mxu0 0.0
    %291 = vmatprep.subr.mxu0 0.0
    %292 = vmatpush1.msra.mxu0 0.0
    %293 = vmatprep.subr.mxu0 0.0
    %294 = vmatpush1.msra.mxu0 0.0
    %295 = vmatprep.subr.mxu0 0.0
    %296 = vmatpush1.msra.mxu0 0.0
    %297 = vmatprep.subr.mxu0 0.0
    %298 = vmatpush1.msra.mxu0 0.0
    %299 = vmatprep.subr.mxu0 0.0
    %300 = vmatpush1.msra.mxu0 %v256
    %301 = vmatprep.subr.mxu0 0.0
    %302 = vmatpush1.msra.mxu0 %v255
    %303 = vmatprep.subr.mxu0 0.0
    %304 = vmatpush2.msra.mxu0 0.0
    %305 = vmatprep.subr.mxu0 0.0
    %306 = vmatpush2.msra.mxu0 0.0
    %307 = vmatprep.subr.mxu0 0.0
    %308 = vmatpush2.msra.mxu0 0.0
    %309 = vmatprep.subr.mxu0 0.0
    %310 = vmatpush2.msra.mxu0 0.0
    %311 = vmatprep.subr.mxu0 0.0
    %312 = vmatpush2.msra.mxu0 0.0
    %313 = vmatprep.subr.mxu0 0.0
    %314 = vmatpush2.msra.mxu0 0.0
    %315 = vmatprep.subr.mxu0 0.0
    %316 = vmatpush2.msra.mxu0 0.0
    %317 = vmatprep.subr.mxu0 0.0
    %318 = vmatpush2.msra.mxu0 0.0
    %319 = vmatprep.subr.mxu0 0.0
    %320 = vmatpush2.msra.mxu0 0.0
    %321 = vmatprep.subr.mxu0 0.0
    %322 = vmatpush2.msra.mxu0 0.0
    %323 = vmatprep.subr.mxu0 0.0
    %324 = vmatpush2.msra.mxu0 0.0
    %325 = vmatprep.subr.mxu0 0.0
    %326 = vmatpush2.msra.mxu0 0.0
    %327 = vmatprep.subr.mxu0 0.0
    %328 = vmatpush2.msra.mxu0 0.0
    %329 = vmatprep.subr.mxu0 0.0
    %330 = vmatpush2.msra.mxu0 0.0
    %331 = vmatprep.subr.mxu0 0.0
    %332 = vmatpush2.msra.mxu0 0.0
    %333 = vmatprep.subr.mxu0 0.0
    %334 = vmatpush2.msra.mxu0 0.0
    %335 = vmatprep.mubr.f32.mxu0 0.0
    %336 = vmatmul.mubr.f32.gmra.mxu0 %v269
    %v337 = vpop.f32.mrf.mxu0
    %v338 = vadd.f32 0.0, %v337
    %v339 = vpop.f32.mrf.mxu0
    %340 = vdwg.mxu0
    %v341 = vmul.f32 %v251, %v338
    %v343 = vsel %vm180, %v341, 0
    %345 = vmatprep.subr.mxu0 0.0
    %346 = vmatpush1.msra.mxu0 0.0
    %347 = vmatprep.subr.mxu0 0.0
    %348 = vmatpush1.msra.mxu0 0.0
    %349 = vmatprep.subr.mxu0 0.0
    %350 = vmatpush1.msra.mxu0 0.0
    %351 = vmatprep.subr.mxu0 0.0
    %352 = vmatpush1.msra.mxu0 0.0
    %353 = vmatprep.subr.mxu0 0.0
    %354 = vmatpush1.msra.mxu0 0.0
    %355 = vmatprep.subr.mxu0 0.0
    %356 = vmatpush1.msra.mxu0 0.0
    %357 = vmatprep.subr.mxu0 0.0
    %358 = vmatpush1.msra.mxu0 0.0
    %359 = vmatprep.subr.mxu0 0.0
    %360 = vmatpush1.msra.mxu0 0.0
    %361 = vmatprep.subr.mxu0 0.0
    %362 = vmatpush1.msra.mxu0 %v264
    %363 = vmatprep.subr.mxu0 0.0
    %364 = vmatpush1.msra.mxu0 %v263
    %365 = vmatprep.subr.mxu0 0.0
    %366 = vmatpush1.msra.mxu0 %v262
    %367 = vmatprep.subr.mxu0 0.0
    %368 = vmatpush1.msra.mxu0 %v261
    %369 = vmatprep.subr.mxu0 0.0
    %370 = vmatpush1.msra.mxu0 %v260
    %371 = vmatprep.subr.mxu0 0.0
    %372 = vmatpush1.msra.mxu0 %v259
    %373 = vmatprep.subr.mxu0 0.0
    %374 = vmatpush1.msra.mxu0 %v258
    %375 = vmatprep.subr.mxu0 0.0
    %376 = vmatpush1.msra.mxu0 %v257
    %377 = vmatprep.subr.mxu0 0.0
    %378 = vmatpush2.msra.mxu0 0.0
    %379 = vmatprep.subr.mxu0 0.0
    %380 = vmatpush2.msra.mxu0 0.0
    %381 = vmatprep.subr.mxu0 0.0
    %382 = vmatpush2.msra.mxu0 0.0
    %383 = vmatprep.subr.mxu0 0.0
    %384 = vmatpush2.msra.mxu0 0.0
    %385 = vmatprep.subr.mxu0 0.0
    %386 = vmatpush2.msra.mxu0 0.0
    %387 = vmatprep.subr.mxu0 0.0
    %388 = vmatpush2.msra.mxu0 0.0
    %389 = vmatprep.subr.mxu0 0.0
    %390 = vmatpush2.msra.mxu0 0.0
    %391 = vmatprep.subr.mxu0 0.0
    %392 = vmatpush2.msra.mxu0 0.0
    %393 = vmatprep.subr.mxu0 0.0
    %394 = vmatpush2.msra.mxu0 0.0
    %395 = vmatprep.subr.mxu0 0.0
    %396 = vmatpush2.msra.mxu0 0.0
    %397 = vmatprep.subr.mxu0 0.0
    %398 = vmatpush2.msra.mxu0 0.0
    %399 = vmatprep.subr.mxu0 0.0
    %400 = vmatpush2.msra.mxu0 0.0
    %401 = vmatprep.subr.mxu0 0.0
    %402 = vmatpush2.msra.mxu0 0.0
    %403 = vmatprep.subr.mxu0 0.0
    %404 = vmatpush2.msra.mxu0 0.0
    %405 = vmatprep.subr.mxu0 0.0
    %406 = vmatpush2.msra.mxu0 0.0
    %407 = vmatprep.subr.mxu0 0.0
    %408 = vmatpush2.msra.mxu0 0.0
    %409 = vmatprep.mubr.f32.mxu0 0.0
    %410 = vmatmul.mubr.f32.gmra.mxu0 %v343
    %v411 = vpop.f32.mrf.mxu0
    %v412 = vadd.f32 0.0, %v411
    %v413 = vpop.f32.mrf.mxu0
    %414 = vdwg.mxu0
    %415 = vrot.lane.b32.xlu0 %v251, 48
    %v416 = vpop.permute.xlu0 %415
    %v417 = vsel %vm268, %v416, 0
    %419 = vmatprep.subr.mxu0 0.0
    %420 = vmatpush1.msra.mxu0 0.0
    %421 = vmatprep.subr.mxu0 0.0
    %422 = vmatpush1.msra.mxu0 0.0
    %423 = vmatprep.subr.mxu0 0.0
    %424 = vmatpush1.msra.mxu0 0.0
    %425 = vmatprep.subr.mxu0 0.0
    %426 = vmatpush1.msra.mxu0 0.0
    %427 = vmatprep.subr.mxu0 0.0
    %428 = vmatpush1.msra.mxu0 0.0
    %429 = vmatprep.subr.mxu0 0.0
    %430 = vmatpush1.msra.mxu0 0.0
    %431 = vmatprep.subr.mxu0 0.0
    %432 = vmatpush1.msra.mxu0 0.0
    %433 = vmatprep.subr.mxu0 0.0
    %434 = vmatpush1.msra.mxu0 0.0
    %435 = vmatprep.subr.mxu0 0.0
    %436 = vmatpush1.msra.mxu0 0.0
    %437 = vmatprep.subr.mxu0 0.0
    %438 = vmatpush1.msra.mxu0 0.0
    %439 = vmatprep.subr.mxu0 0.0
    %440 = vmatpush1.msra.mxu0 0.0
    %441 = vmatprep.subr.mxu0 0.0
    %442 = vmatpush1.msra.mxu0 0.0
    %443 = vmatprep.subr.mxu0 0.0
    %444 = vmatpush1.msra.mxu0 0.0
    %445 = vmatprep.subr.mxu0 0.0
    %446 = vmatpush1.msra.mxu0 0.0
    %447 = vmatprep.subr.mxu0 0.0
    %448 = vmatpush1.msra.mxu0 %v256
    %449 = vmatprep.subr.mxu0 0.0
    %450 = vmatpush1.msra.mxu0 %v255
    %451 = vmatprep.subr.mxu0 0.0
    %452 = vmatpush2.msra.mxu0 0.0
    %453 = vmatprep.subr.mxu0 0.0
    %454 = vmatpush2.msra.mxu0 0.0
    %455 = vmatprep.subr.mxu0 0.0
    %456 = vmatpush2.msra.mxu0 0.0
    %457 = vmatprep.subr.mxu0 0.0
    %458 = vmatpush2.msra.mxu0 0.0
    %459 = vmatprep.subr.mxu0 0.0
    %460 = vmatpush2.msra.mxu0 0.0
    %461 = vmatprep.subr.mxu0 0.0
    %462 = vmatpush2.msra.mxu0 0.0
    %463 = vmatprep.subr.mxu0 0.0
    %464 = vmatpush2.msra.mxu0 0.0
    %465 = vmatprep.subr.mxu0 0.0
    %466 = vmatpush2.msra.mxu0 0.0
    %467 = vmatprep.subr.mxu0 0.0
    %468 = vmatpush2.msra.mxu0 0.0
    %469 = vmatprep.subr.mxu0 0.0
    %470 = vmatpush2.msra.mxu0 0.0
    %471 = vmatprep.subr.mxu0 0.0
    %472 = vmatpush2.msra.mxu0 0.0
    %473 = vmatprep.subr.mxu0 0.0
    %474 = vmatpush2.msra.mxu0 0.0
    %475 = vmatprep.subr.mxu0 0.0
    %476 = vmatpush2.msra.mxu0 0.0
    %477 = vmatprep.subr.mxu0 0.0
    %478 = vmatpush2.msra.mxu0 0.0
    %479 = vmatprep.subr.mxu0 0.0
    %480 = vmatpush2.msra.mxu0 0.0
    %481 = vmatprep.subr.mxu0 0.0
    %482 = vmatpush2.msra.mxu0 0.0
    %483 = vmatprep.mubr.f32.mxu0 0.0
    %484 = vmatmul.mubr.f32.gmra.mxu0 %v417
    %v485 = vpop.f32.mrf.mxu0
    %v486 = vadd.f32 0.0, %v485
    %v487 = vpop.f32.mrf.mxu0
    %488 = vdwg.mxu0
    %v489 = vmul.f32 %v251, %v486
    %v491 = vsel %vm180, %v489, 0
    %493 = vmatprep.subr.mxu0 0.0
    %494 = vmatpush1.msra.mxu0 0.0
    %495 = vmatprep.subr.mxu0 0.0
    %496 = vmatpush1.msra.mxu0 0.0
    %497 = vmatprep.subr.mxu0 0.0
    %498 = vmatpush1.msra.mxu0 0.0
    %499 = vmatprep.subr.mxu0 0.0
    %500 = vmatpush1.msra.mxu0 0.0
    %501 = vmatprep.subr.mxu0 0.0
    %502 = vmatpush1.msra.mxu0 0.0
    %503 = vmatprep.subr.mxu0 0.0
    %504 = vmatpush1.msra.mxu0 0.0
    %505 = vmatprep.subr.mxu0 0.0
    %506 = vmatpush1.msra.mxu0 0.0
    %507 = vmatprep.subr.mxu0 0.0
    %508 = vmatpush1.msra.mxu0 0.0
    %509 = vmatprep.subr.mxu0 0.0
    %510 = vmatpush1.msra.mxu0 %v264
    %511 = vmatprep.subr.mxu0 0.0
    %512 = vmatpush1.msra.mxu0 %v263
    %513 = vmatprep.subr.mxu0 0.0
    %514 = vmatpush1.msra.mxu0 %v262
    %515 = vmatprep.subr.mxu0 0.0
    %516 = vmatpush1.msra.mxu0 %v261
    %517 = vmatprep.subr.mxu0 0.0
    %518 = vmatpush1.msra.mxu0 %v260
    %519 = vmatprep.subr.mxu0 0.0
    %520 = vmatpush1.msra.mxu0 %v259
    %521 = vmatprep.subr.mxu0 0.0
    %522 = vmatpush1.msra.mxu0 %v258
    %523 = vmatprep.subr.mxu0 0.0
    %524 = vmatpush1.msra.mxu0 %v257
    %525 = vmatprep.subr.mxu0 0.0
    %526 = vmatpush2.msra.mxu0 0.0
    %527 = vmatprep.subr.mxu0 0.0
    %528 = vmatpush2.msra.mxu0 0.0
    %529 = vmatprep.subr.mxu0 0.0
    %530 = vmatpush2.msra.mxu0 0.0
    %531 = vmatprep.subr.mxu0 0.0
    %532 = vmatpush2.msra.mxu0 0.0
    %533 = vmatprep.subr.mxu0 0.0
    %534 = vmatpush2.msra.mxu0 0.0
    %535 = vmatprep.subr.mxu0 0.0
    %536 = vmatpush2.msra.mxu0 0.0
    %537 = vmatprep.subr.mxu0 0.0
    %538 = vmatpush2.msra.mxu0 0.0
    %539 = vmatprep.subr.mxu0 0.0
    %540 = vmatpush2.msra.mxu0 0.0
    %541 = vmatprep.subr.mxu0 0.0
    %542 = vmatpush2.msra.mxu0 0.0
    %543 = vmatprep.subr.mxu0 0.0
    %544 = vmatpush2.msra.mxu0 0.0
    %545 = vmatprep.subr.mxu0 0.0
    %546 = vmatpush2.msra.mxu0 0.0
    %547 = vmatprep.subr.mxu0 0.0
    %548 = vmatpush2.msra.mxu0 0.0
    %549 = vmatprep.subr.mxu0 0.0
    %550 = vmatpush2.msra.mxu0 0.0
    %551 = vmatprep.subr.mxu0 0.0
    %552 = vmatpush2.msra.mxu0 0.0
    %553 = vmatprep.subr.mxu0 0.0
    %554 = vmatpush2.msra.mxu0 0.0
    %555 = vmatprep.subr.mxu0 0.0
    %556 = vmatpush2.msra.mxu0 0.0
    %557 = vmatprep.mubr.f32.mxu0 0.0
    %558 = vmatmul.mubr.f32.gmra.mxu0 %v491
    %v559 = vpop.f32.mrf.mxu0
    %v560 = vadd.f32 0.0, %v559
    %v561 = vpop.f32.mrf.mxu0
    %562 = vdwg.mxu0
    %563 = vrot.lane.b32.xlu0 %v251, 32
    %v564 = vpop.permute.xlu0 %563
    %v565 = vsel %vm268, %v564, 0
    %567 = vmatprep.subr.mxu0 0.0
    %568 = vmatpush1.msra.mxu0 0.0
    %569 = vmatprep.subr.mxu0 0.0
    %570 = vmatpush1.msra.mxu0 0.0
    %571 = vmatprep.subr.mxu0 0.0
    %572 = vmatpush1.msra.mxu0 0.0
    %573 = vmatprep.subr.mxu0 0.0
    %574 = vmatpush1.msra.mxu0 0.0
    %575 = vmatprep.subr.mxu0 0.0
    %576 = vmatpush1.msra.mxu0 0.0
    %577 = vmatprep.subr.mxu0 0.0
    %578 = vmatpush1.msra.mxu0 0.0
    %579 = vmatprep.subr.mxu0 0.0
    %580 = vmatpush1.msra.mxu0 0.0
    %581 = vmatprep.subr.mxu0 0.0
    %582 = vmatpush1.msra.mxu0 0.0
    %583 = vmatprep.subr.mxu0 0.0
    %584 = vmatpush1.msra.mxu0 0.0
    %585 = vmatprep.subr.mxu0 0.0
    %586 = vmatpush1.msra.mxu0 0.0
    %587 = vmatprep.subr.mxu0 0.0
    %588 = vmatpush1.msra.mxu0 0.0
    %589 = vmatprep.subr.mxu0 0.0
    %590 = vmatpush1.msra.mxu0 0.0
    %591 = vmatprep.subr.mxu0 0.0
    %592 = vmatpush1.msra.mxu0 0.0
    %593 = vmatprep.subr.mxu0 0.0
    %594 = vmatpush1.msra.mxu0 0.0
    %595 = vmatprep.subr.mxu0 0.0
    %596 = vmatpush1.msra.mxu0 %v256
    %597 = vmatprep.subr.mxu0 0.0
    %598 = vmatpush1.msra.mxu0 %v255
    %599 = vmatprep.subr.mxu0 0.0
    %600 = vmatpush2.msra.mxu0 0.0
    %601 = vmatprep.subr.mxu0 0.0
    %602 = vmatpush2.msra.mxu0 0.0
    %603 = vmatprep.subr.mxu0 0.0
    %604 = vmatpush2.msra.mxu0 0.0
    %605 = vmatprep.subr.mxu0 0.0
    %606 = vmatpush2.msra.mxu0 0.0
    %607 = vmatprep.subr.mxu0 0.0
    %608 = vmatpush2.msra.mxu0 0.0
    %609 = vmatprep.subr.mxu0 0.0
    %610 = vmatpush2.msra.mxu0 0.0
    %611 = vmatprep.subr.mxu0 0.0
    %612 = vmatpush2.msra.mxu0 0.0
    %613 = vmatprep.subr.mxu0 0.0
    %614 = vmatpush2.msra.mxu0 0.0
    %615 = vmatprep.subr.mxu0 0.0
    %616 = vmatpush2.msra.mxu0 0.0
    %617 = vmatprep.subr.mxu0 0.0
    %618 = vmatpush2.msra.mxu0 0.0
    %619 = vmatprep.subr.mxu0 0.0
    %620 = vmatpush2.msra.mxu0 0.0
    %621 = vmatprep.subr.mxu0 0.0
    %622 = vmatpush2.msra.mxu0 0.0
    %623 = vmatprep.subr.mxu0 0.0
    %624 = vmatpush2.msra.mxu0 0.0
    %625 = vmatprep.subr.mxu0 0.0
    %626 = vmatpush2.msra.mxu0 0.0
    %627 = vmatprep.subr.mxu0 0.0
    %628 = vmatpush2.msra.mxu0 0.0
    %629 = vmatprep.subr.mxu0 0.0
    %630 = vmatpush2.msra.mxu0 0.0
    %631 = vmatprep.mubr.f32.mxu0 0.0
    %632 = vmatmul.mubr.f32.gmra.mxu0 %v565
    %v633 = vpop.f32.mrf.mxu0
    %v634 = vadd.f32 0.0, %v633
    %v635 = vpop.f32.mrf.mxu0
    %636 = vdwg.mxu0
    %v637 = vmul.f32 %v251, %v634
    %v639 = vsel %vm180, %v637, 0
    %641 = vmatprep.subr.mxu0 0.0
    %642 = vmatpush1.msra.mxu0 0.0
    %643 = vmatprep.subr.mxu0 0.0
    %644 = vmatpush1.msra.mxu0 0.0
    %645 = vmatprep.subr.mxu0 0.0
    %646 = vmatpush1.msra.mxu0 0.0
    %647 = vmatprep.subr.mxu0 0.0
    %648 = vmatpush1.msra.mxu0 0.0
    %649 = vmatprep.subr.mxu0 0.0
    %650 = vmatpush1.msra.mxu0 0.0
    %651 = vmatprep.subr.mxu0 0.0
    %652 = vmatpush1.msra.mxu0 0.0
    %653 = vmatprep.subr.mxu0 0.0
    %654 = vmatpush1.msra.mxu0 0.0
    %655 = vmatprep.subr.mxu0 0.0
    %656 = vmatpush1.msra.mxu0 0.0
    %657 = vmatprep.subr.mxu0 0.0
    %658 = vmatpush1.msra.mxu0 %v264
    %659 = vmatprep.subr.mxu0 0.0
    %660 = vmatpush1.msra.mxu0 %v263
    %661 = vmatprep.subr.mxu0 0.0
    %662 = vmatpush1.msra.mxu0 %v262
    %663 = vmatprep.subr.mxu0 0.0
    %664 = vmatpush1.msra.mxu0 %v261
    %665 = vmatprep.subr.mxu0 0.0
    %666 = vmatpush1.msra.mxu0 %v260
    %667 = vmatprep.subr.mxu0 0.0
    %668 = vmatpush1.msra.mxu0 %v259
    %669 = vmatprep.subr.mxu0 0.0
    %670 = vmatpush1.msra.mxu0 %v258
    %671 = vmatprep.subr.mxu0 0.0
    %672 = vmatpush1.msra.mxu0 %v257
    %673 = vmatprep.subr.mxu0 0.0
    %674 = vmatpush2.msra.mxu0 0.0
    %675 = vmatprep.subr.mxu0 0.0
    %676 = vmatpush2.msra.mxu0 0.0
    %677 = vmatprep.subr.mxu0 0.0
    %678 = vmatpush2.msra.mxu0 0.0
    %679 = vmatprep.subr.mxu0 0.0
    %680 = vmatpush2.msra.mxu0 0.0
    %681 = vmatprep.subr.mxu0 0.0
    %682 = vmatpush2.msra.mxu0 0.0
    %683 = vmatprep.subr.mxu0 0.0
    %684 = vmatpush2.msra.mxu0 0.0
    %685 = vmatprep.subr.mxu0 0.0
    %686 = vmatpush2.msra.mxu0 0.0
    %687 = vmatprep.subr.mxu0 0.0
    %688 = vmatpush2.msra.mxu0 0.0
    %689 = vmatprep.subr.mxu0 0.0
    %690 = vmatpush2.msra.mxu0 0.0
    %691 = vmatprep.subr.mxu0 0.0
    %692 = vmatpush2.msra.mxu0 0.0
    %693 = vmatprep.subr.mxu0 0.0
    %694 = vmatpush2.msra.mxu0 0.0
    %695 = vmatprep.subr.mxu0 0.0
    %696 = vmatpush2.msra.mxu0 0.0
    %697 = vmatprep.subr.mxu0 0.0
    %698 = vmatpush2.msra.mxu0 0.0
    %699 = vmatprep.subr.mxu0 0.0
    %700 = vmatpush2.msra.mxu0 0.0
    %701 = vmatprep.subr.mxu0 0.0
    %702 = vmatpush2.msra.mxu0 0.0
    %703 = vmatprep.subr.mxu0 0.0
    %704 = vmatpush2.msra.mxu0 0.0
    %705 = vmatprep.mubr.f32.mxu0 0.0
    %706 = vmatmul.mubr.f32.gmra.mxu0 %v639
    %v707 = vpop.f32.mrf.mxu0
    %v708 = vadd.f32 0.0, %v707
    %v709 = vpop.f32.mrf.mxu0
    %710 = vdwg.mxu0
    %711 = vrot.lane.b32.xlu0 %v251, 16
    %v712 = vpop.permute.xlu0 %711
    %v713 = vsel %vm268, %v712, 0
    %715 = vmatprep.subr.mxu0 0.0
    %716 = vmatpush1.msra.mxu0 0.0
    %717 = vmatprep.subr.mxu0 0.0
    %718 = vmatpush1.msra.mxu0 0.0
    %719 = vmatprep.subr.mxu0 0.0
    %720 = vmatpush1.msra.mxu0 0.0
    %721 = vmatprep.subr.mxu0 0.0
    %722 = vmatpush1.msra.mxu0 0.0
    %723 = vmatprep.subr.mxu0 0.0
    %724 = vmatpush1.msra.mxu0 0.0
    %725 = vmatprep.subr.mxu0 0.0
    %726 = vmatpush1.msra.mxu0 0.0
    %727 = vmatprep.subr.mxu0 0.0
    %728 = vmatpush1.msra.mxu0 0.0
    %729 = vmatprep.subr.mxu0 0.0
    %730 = vmatpush1.msra.mxu0 0.0
    %731 = vmatprep.subr.mxu0 0.0
    %732 = vmatpush1.msra.mxu0 0.0
    %733 = vmatprep.subr.mxu0 0.0
    %734 = vmatpush1.msra.mxu0 0.0
    %735 = vmatprep.subr.mxu0 0.0
    %736 = vmatpush1.msra.mxu0 0.0
    %737 = vmatprep.subr.mxu0 0.0
    %738 = vmatpush1.msra.mxu0 0.0
    %739 = vmatprep.subr.mxu0 0.0
    %740 = vmatpush1.msra.mxu0 0.0
    %741 = vmatprep.subr.mxu0 0.0
    %742 = vmatpush1.msra.mxu0 0.0
    %743 = vmatprep.subr.mxu0 0.0
    %744 = vmatpush1.msra.mxu0 %v256
    %745 = vmatprep.subr.mxu0 0.0
    %746 = vmatpush1.msra.mxu0 %v255
    %747 = vmatprep.subr.mxu0 0.0
    %748 = vmatpush2.msra.mxu0 0.0
    %749 = vmatprep.subr.mxu0 0.0
    %750 = vmatpush2.msra.mxu0 0.0
    %751 = vmatprep.subr.mxu0 0.0
    %752 = vmatpush2.msra.mxu0 0.0
    %753 = vmatprep.subr.mxu0 0.0
    %754 = vmatpush2.msra.mxu0 0.0
    %755 = vmatprep.subr.mxu0 0.0
    %756 = vmatpush2.msra.mxu0 0.0
    %757 = vmatprep.subr.mxu0 0.0
    %758 = vmatpush2.msra.mxu0 0.0
    %759 = vmatprep.subr.mxu0 0.0
    %760 = vmatpush2.msra.mxu0 0.0
    %761 = vmatprep.subr.mxu0 0.0
    %762 = vmatpush2.msra.mxu0 0.0
    %763 = vmatprep.subr.mxu0 0.0
    %764 = vmatpush2.msra.mxu0 0.0
    %765 = vmatprep.subr.mxu0 0.0
    %766 = vmatpush2.msra.mxu0 0.0
    %767 = vmatprep.subr.mxu0 0.0
    %768 = vmatpush2.msra.mxu0 0.0
    %769 = vmatprep.subr.mxu0 0.0
    %770 = vmatpush2.msra.mxu0 0.0
    %771 = vmatprep.subr.mxu0 0.0
    %772 = vmatpush2.msra.mxu0 0.0
    %773 = vmatprep.subr.mxu0 0.0
    %774 = vmatpush2.msra.mxu0 0.0
    %775 = vmatprep.subr.mxu0 0.0
    %776 = vmatpush2.msra.mxu0 0.0
    %777 = vmatprep.subr.mxu0 0.0
    %778 = vmatpush2.msra.mxu0 0.0
    %779 = vmatprep.mubr.f32.mxu0 0.0
    %780 = vmatmul.mubr.f32.gmra.mxu0 %v713
    %v781 = vpop.f32.mrf.mxu0
    %v782 = vadd.f32 0.0, %v781
    %v783 = vpop.f32.mrf.mxu0
    %784 = vdwg.mxu0
    %v785 = vmul.f32 %v251, %v782
    %v787 = vsel %vm180, %v785, 0
    %789 = vmatprep.subr.mxu0 0.0
    %790 = vmatpush1.msra.mxu0 0.0
    %791 = vmatprep.subr.mxu0 0.0
    %792 = vmatpush1.msra.mxu0 0.0
    %793 = vmatprep.subr.mxu0 0.0
    %794 = vmatpush1.msra.mxu0 0.0
    %795 = vmatprep.subr.mxu0 0.0
    %796 = vmatpush1.msra.mxu0 0.0
    %797 = vmatprep.subr.mxu0 0.0
    %798 = vmatpush1.msra.mxu0 0.0
    %799 = vmatprep.subr.mxu0 0.0
    %800 = vmatpush1.msra.mxu0 0.0
    %801 = vmatprep.subr.mxu0 0.0
    %802 = vmatpush1.msra.mxu0 0.0
    %803 = vmatprep.subr.mxu0 0.0
    %804 = vmatpush1.msra.mxu0 0.0
    %805 = vmatprep.subr.mxu0 0.0
    %806 = vmatpush1.msra.mxu0 %v264
    %807 = vmatprep.subr.mxu0 0.0
    %808 = vmatpush1.msra.mxu0 %v263
    %809 = vmatprep.subr.mxu0 0.0
    %810 = vmatpush1.msra.mxu0 %v262
    %811 = vmatprep.subr.mxu0 0.0
    %812 = vmatpush1.msra.mxu0 %v261
    %813 = vmatprep.subr.mxu0 0.0
    %814 = vmatpush1.msra.mxu0 %v260
    %815 = vmatprep.subr.mxu0 0.0
    %816 = vmatpush1.msra.mxu0 %v259
    %817 = vmatprep.subr.mxu0 0.0
    %818 = vmatpush1.msra.mxu0 %v258
    %819 = vmatprep.subr.mxu0 0.0
    %820 = vmatpush1.msra.mxu0 %v257
    %821 = vmatprep.subr.mxu0 0.0
    %822 = vmatpush2.msra.mxu0 0.0
    %823 = vmatprep.subr.mxu0 0.0
    %824 = vmatpush2.msra.mxu0 0.0
    %825 = vmatprep.subr.mxu0 0.0
    %826 = vmatpush2.msra.mxu0 0.0
    %827 = vmatprep.subr.mxu0 0.0
    %828 = vmatpush2.msra.mxu0 0.0
    %829 = vmatprep.subr.mxu0 0.0
    %830 = vmatpush2.msra.mxu0 0.0
    %831 = vmatprep.subr.mxu0 0.0
    %832 = vmatpush2.msra.mxu0 0.0
    %833 = vmatprep.subr.mxu0 0.0
    %834 = vmatpush2.msra.mxu0 0.0
    %835 = vmatprep.subr.mxu0 0.0
    %836 = vmatpush2.msra.mxu0 0.0
    %837 = vmatprep.subr.mxu0 0.0
    %838 = vmatpush2.msra.mxu0 0.0
    %839 = vmatprep.subr.mxu0 0.0
    %840 = vmatpush2.msra.mxu0 0.0
    %841 = vmatprep.subr.mxu0 0.0
    %842 = vmatpush2.msra.mxu0 0.0
    %843 = vmatprep.subr.mxu0 0.0
    %844 = vmatpush2.msra.mxu0 0.0
    %845 = vmatprep.subr.mxu0 0.0
    %846 = vmatpush2.msra.mxu0 0.0
    %847 = vmatprep.subr.mxu0 0.0
    %848 = vmatpush2.msra.mxu0 0.0
    %849 = vmatprep.subr.mxu0 0.0
    %850 = vmatpush2.msra.mxu0 0.0
    %851 = vmatprep.subr.mxu0 0.0
    %852 = vmatpush2.msra.mxu0 0.0
    %853 = vmatprep.mubr.f32.mxu0 0.0
    %854 = vmatmul.mubr.f32.gmra.mxu0 %v787
    %v855 = vpop.f32.mrf.mxu0
    %v856 = vadd.f32 0.0, %v855
    %v857 = vpop.f32.mrf.mxu0
    %858 = vdwg.mxu0
    %v859 = vmax.f32 %v412, %v560
    %v860 = vmax.f32 %v859, %v708
    %v861 = vmax.f32 %v860, %v856
    %v862 = vsub.f32 %v412, %v861
    %v863 = vmul.f32 %v862, 1.442695
    %v864 = vpow.pop %v863
    %v865 = vsub.f32 %v560, %v861
    %v866 = vmul.f32 %v865, 1.442695
    %v867 = vpow.pop %v866
    %v868 = vsub.f32 %v708, %v861
    %v869 = vmul.f32 %v868, 1.442695
    %v870 = vpow.pop %v869
    %v871 = vsub.f32 %v856, %v861
    %v872 = vmul.f32 %v871, 1.442695
    %v873 = vpow.pop %v872
    %v874 = vadd.f32 %v864, %v867
    %v875 = vadd.f32 %v874, %v870
    %v876 = vadd.f32 %v875, %v873
    %v877 = vrcp.pop %v876
    %v878 = vld [vmem:[#allocation6] sm:$0xff]
    %v879 = vld [vmem:[#allocation6 + $0x8] sm:$0xff]
    %v880 = vmul.f32 %v864, %v877
    %v882 = vsel %vm268, %v880, 0
    %884 = vmatprep.subr.mxu0 0.0
    %885 = vmatpush1.msra.mxu0 0.0
    %886 = vmatprep.subr.mxu0 0.0
    %887 = vmatpush1.msra.mxu0 0.0
    %888 = vmatprep.subr.mxu0 0.0
    %889 = vmatpush1.msra.mxu0 0.0
    %890 = vmatprep.subr.mxu0 0.0
    %891 = vmatpush1.msra.mxu0 0.0
    %892 = vmatprep.subr.mxu0 0.0
    %893 = vmatpush1.msra.mxu0 0.0
    %894 = vmatprep.subr.mxu0 0.0
    %895 = vmatpush1.msra.mxu0 0.0
    %896 = vmatprep.subr.mxu0 0.0
    %897 = vmatpush1.msra.mxu0 0.0
    %898 = vmatprep.subr.mxu0 0.0
    %899 = vmatpush1.msra.mxu0 0.0
    %900 = vmatprep.subr.mxu0 0.0
    %901 = vmatpush1.msra.mxu0 0.0
    %902 = vmatprep.subr.mxu0 0.0
    %903 = vmatpush1.msra.mxu0 0.0
    %904 = vmatprep.subr.mxu0 0.0
    %905 = vmatpush1.msra.mxu0 0.0
    %906 = vmatprep.subr.mxu0 0.0
    %907 = vmatpush1.msra.mxu0 0.0
    %908 = vmatprep.subr.mxu0 0.0
    %909 = vmatpush1.msra.mxu0 0.0
    %910 = vmatprep.subr.mxu0 0.0
    %911 = vmatpush1.msra.mxu0 0.0
    %912 = vmatprep.subr.mxu0 0.0
    %913 = vmatpush1.msra.mxu0 %v879
    %914 = vmatprep.subr.mxu0 0.0
    %915 = vmatpush1.msra.mxu0 %v878
    %916 = vmatprep.subr.mxu0 0.0
    %917 = vmatpush2.msra.mxu0 0.0
    %918 = vmatprep.subr.mxu0 0.0
    %919 = vmatpush2.msra.mxu0 0.0
    %920 = vmatprep.subr.mxu0 0.0
    %921 = vmatpush2.msra.mxu0 0.0
    %922 = vmatprep.subr.mxu0 0.0
    %923 = vmatpush2.msra.mxu0 0.0
    %924 = vmatprep.subr.mxu0 0.0
    %925 = vmatpush2.msra.mxu0 0.0
    %926 = vmatprep.subr.mxu0 0.0
    %927 = vmatpush2.msra.mxu0 0.0
    %928 = vmatprep.subr.mxu0 0.0
    %929 = vmatpush2.msra.mxu0 0.0
    %930 = vmatprep.subr.mxu0 0.0
    %931 = vmatpush2.msra.mxu0 0.0
    %932 = vmatprep.subr.mxu0 0.0
    %933 = vmatpush2.msra.mxu0 0.0
    %934 = vmatprep.subr.mxu0 0.0
    %935 = vmatpush2.msra.mxu0 0.0
    %936 = vmatprep.subr.mxu0 0.0
    %937 = vmatpush2.msra.mxu0 0.0
    %938 = vmatprep.subr.mxu0 0.0
    %939 = vmatpush2.msra.mxu0 0.0
    %940 = vmatprep.subr.mxu0 0.0
    %941 = vmatpush2.msra.mxu0 0.0
    %942 = vmatprep.subr.mxu0 0.0
    %943 = vmatpush2.msra.mxu0 0.0
    %944 = vmatprep.subr.mxu0 0.0
    %945 = vmatpush2.msra.mxu0 0.0
    %946 = vmatprep.subr.mxu0 0.0
    %947 = vmatpush2.msra.mxu0 0.0
    %948 = vmatprep.mubr.f32.mxu0 0.0
    %949 = vmatmul.mubr.f32.gmra.mxu0 %v882
    %v950 = vpop.f32.mrf.mxu0
    %v951 = vadd.f32 0.0, %v950
    %v952 = vpop.f32.mrf.mxu0
    %953 = vdwg.mxu0
    %v954 = vmul.f32 %v951, %v253
    %v955 = vmul.f32 %v867, %v877
    %v957 = vsel %vm268, %v955, 0
    %959 = vmatprep.subr.mxu0 0.0
    %960 = vmatpush1.msra.mxu0 0.0
    %961 = vmatprep.subr.mxu0 0.0
    %962 = vmatpush1.msra.mxu0 0.0
    %963 = vmatprep.subr.mxu0 0.0
    %964 = vmatpush1.msra.mxu0 0.0
    %965 = vmatprep.subr.mxu0 0.0
    %966 = vmatpush1.msra.mxu0 0.0
    %967 = vmatprep.subr.mxu0 0.0
    %968 = vmatpush1.msra.mxu0 0.0
    %969 = vmatprep.subr.mxu0 0.0
    %970 = vmatpush1.msra.mxu0 0.0
    %971 = vmatprep.subr.mxu0 0.0
    %972 = vmatpush1.msra.mxu0 0.0
    %973 = vmatprep.subr.mxu0 0.0
    %974 = vmatpush1.msra.mxu0 0.0
    %975 = vmatprep.subr.mxu0 0.0
    %976 = vmatpush1.msra.mxu0 0.0
    %977 = vmatprep.subr.mxu0 0.0
    %978 = vmatpush1.msra.mxu0 0.0
    %979 = vmatprep.subr.mxu0 0.0
    %980 = vmatpush1.msra.mxu0 0.0
    %981 = vmatprep.subr.mxu0 0.0
    %982 = vmatpush1.msra.mxu0 0.0
    %983 = vmatprep.subr.mxu0 0.0
    %984 = vmatpush1.msra.mxu0 0.0
    %985 = vmatprep.subr.mxu0 0.0
    %986 = vmatpush1.msra.mxu0 0.0
    %987 = vmatprep.subr.mxu0 0.0
    %988 = vmatpush1.msra.mxu0 %v879
    %989 = vmatprep.subr.mxu0 0.0
    %990 = vmatpush1.msra.mxu0 %v878
    %991 = vmatprep.subr.mxu0 0.0
    %992 = vmatpush2.msra.mxu0 0.0
    %993 = vmatprep.subr.mxu0 0.0
    %994 = vmatpush2.msra.mxu0 0.0
    %995 = vmatprep.subr.mxu0 0.0
    %996 = vmatpush2.msra.mxu0 0.0
    %997 = vmatprep.subr.mxu0 0.0
    %998 = vmatpush2.msra.mxu0 0.0
    %999 = vmatprep.subr.mxu0 0.0
    %1000 = vmatpush2.msra.mxu0 0.0
    %1001 = vmatprep.subr.mxu0 0.0
    %1002 = vmatpush2.msra.mxu0 0.0
    %1003 = vmatprep.subr.mxu0 0.0
    %1004 = vmatpush2.msra.mxu0 0.0
    %1005 = vmatprep.subr.mxu0 0.0
    %1006 = vmatpush2.msra.mxu0 0.0
    %1007 = vmatprep.subr.mxu0 0.0
    %1008 = vmatpush2.msra.mxu0 0.0
    %1009 = vmatprep.subr.mxu0 0.0
    %1010 = vmatpush2.msra.mxu0 0.0
    %1011 = vmatprep.subr.mxu0 0.0
    %1012 = vmatpush2.msra.mxu0 0.0
    %1013 = vmatprep.subr.mxu0 0.0
    %1014 = vmatpush2.msra.mxu0 0.0
    %1015 = vmatprep.subr.mxu0 0.0
    %1016 = vmatpush2.msra.mxu0 0.0
    %1017 = vmatprep.subr.mxu0 0.0
    %1018 = vmatpush2.msra.mxu0 0.0
    %1019 = vmatprep.subr.mxu0 0.0
    %1020 = vmatpush2.msra.mxu0 0.0
    %1021 = vmatprep.subr.mxu0 0.0
    %1022 = vmatpush2.msra.mxu0 0.0
    %1023 = vmatprep.mubr.f32.mxu0 0.0
    %1024 = vmatmul.mubr.f32.gmra.mxu0 %v957
    %v1025 = vpop.f32.mrf.mxu0
    %v1026 = vadd.f32 0.0, %v1025
    %v1027 = vpop.f32.mrf.mxu0
    %1028 = vdwg.mxu0
    %1030 = vrot.lane.b32.xlu0 %v253, 112
    %v1031 = vpop.permute.xlu0 %1030
    %v1033 = vmul.f32 %v1026, %v1031
    %v1034 = vadd.f32 %v954, %v1033
    %v1035 = vmul.f32 %v870, %v877
    %v1037 = vsel %vm268, %v1035, 0
    %1039 = vmatprep.subr.mxu0 0.0
    %1040 = vmatpush1.msra.mxu0 0.0
    %1041 = vmatprep.subr.mxu0 0.0
    %1042 = vmatpush1.msra.mxu0 0.0
    %1043 = vmatprep.subr.mxu0 0.0
    %1044 = vmatpush1.msra.mxu0 0.0
    %1045 = vmatprep.subr.mxu0 0.0
    %1046 = vmatpush1.msra.mxu0 0.0
    %1047 = vmatprep.subr.mxu0 0.0
    %1048 = vmatpush1.msra.mxu0 0.0
    %1049 = vmatprep.subr.mxu0 0.0
    %1050 = vmatpush1.msra.mxu0 0.0
    %1051 = vmatprep.subr.mxu0 0.0
    %1052 = vmatpush1.msra.mxu0 0.0
    %1053 = vmatprep.subr.mxu0 0.0
    %1054 = vmatpush1.msra.mxu0 0.0
    %1055 = vmatprep.subr.mxu0 0.0
    %1056 = vmatpush1.msra.mxu0 0.0
    %1057 = vmatprep.subr.mxu0 0.0
    %1058 = vmatpush1.msra.mxu0 0.0
    %1059 = vmatprep.subr.mxu0 0.0
    %1060 = vmatpush1.msra.mxu0 0.0
    %1061 = vmatprep.subr.mxu0 0.0
    %1062 = vmatpush1.msra.mxu0 0.0
    %1063 = vmatprep.subr.mxu0 0.0
    %1064 = vmatpush1.msra.mxu0 0.0
    %1065 = vmatprep.subr.mxu0 0.0
    %1066 = vmatpush1.msra.mxu0 0.0
    %1067 = vmatprep.subr.mxu0 0.0
    %1068 = vmatpush1.msra.mxu0 %v879
    %1069 = vmatprep.subr.mxu0 0.0
    %1070 = vmatpush1.msra.mxu0 %v878
    %1071 = vmatprep.subr.mxu0 0.0
    %1072 = vmatpush2.msra.mxu0 0.0
    %1073 = vmatprep.subr.mxu0 0.0
    %1074 = vmatpush2.msra.mxu0 0.0
    %1075 = vmatprep.subr.mxu0 0.0
    %1076 = vmatpush2.msra.mxu0 0.0
    %1077 = vmatprep.subr.mxu0 0.0
    %1078 = vmatpush2.msra.mxu0 0.0
    %1079 = vmatprep.subr.mxu0 0.0
    %1080 = vmatpush2.msra.mxu0 0.0
    %1081 = vmatprep.subr.mxu0 0.0
    %1082 = vmatpush2.msra.mxu0 0.0
    %1083 = vmatprep.subr.mxu0 0.0
    %1084 = vmatpush2.msra.mxu0 0.0
    %1085 = vmatprep.subr.mxu0 0.0
    %1086 = vmatpush2.msra.mxu0 0.0
    %1087 = vmatprep.subr.mxu0 0.0
    %1088 = vmatpush2.msra.mxu0 0.0
    %1089 = vmatprep.subr.mxu0 0.0
    %1090 = vmatpush2.msra.mxu0 0.0
    %1091 = vmatprep.subr.mxu0 0.0
    %1092 = vmatpush2.msra.mxu0 0.0
    %1093 = vmatprep.subr.mxu0 0.0
    %1094 = vmatpush2.msra.mxu0 0.0
    %1095 = vmatprep.subr.mxu0 0.0
    %1096 = vmatpush2.msra.mxu0 0.0
    %1097 = vmatprep.subr.mxu0 0.0
    %1098 = vmatpush2.msra.mxu0 0.0
    %1099 = vmatprep.subr.mxu0 0.0
    %1100 = vmatpush2.msra.mxu0 0.0
    %1101 = vmatprep.subr.mxu0 0.0
    %1102 = vmatpush2.msra.mxu0 0.0
    %1103 = vmatprep.mubr.f32.mxu0 0.0
    %1104 = vmatmul.mubr.f32.gmra.mxu0 %v1037
    %v1105 = vpop.f32.mrf.mxu0
    %v1106 = vadd.f32 0.0, %v1105
    %v1107 = vpop.f32.mrf.mxu0
    %1108 = vdwg.mxu0
    %1109 = vrot.lane.b32.xlu0 %v253, 96
    %v1110 = vpop.permute.xlu0 %1109
    %v1112 = vmul.f32 %v1106, %v1110
    %v1113 = vadd.f32 %v1034, %v1112
    %v1114 = vmul.f32 %v873, %v877
    %v1116 = vsel %vm268, %v1114, 0
    %1118 = vmatprep.subr.mxu0 0.0
    %1119 = vmatpush1.msra.mxu0 0.0
    %1120 = vmatprep.subr.mxu0 0.0
    %1121 = vmatpush1.msra.mxu0 0.0
    %1122 = vmatprep.subr.mxu0 0.0
    %1123 = vmatpush1.msra.mxu0 0.0
    %1124 = vmatprep.subr.mxu0 0.0
    %1125 = vmatpush1.msra.mxu0 0.0
    %1126 = vmatprep.subr.mxu0 0.0
    %1127 = vmatpush1.msra.mxu0 0.0
    %1128 = vmatprep.subr.mxu0 0.0
    %1129 = vmatpush1.msra.mxu0 0.0
    %1130 = vmatprep.subr.mxu0 0.0
    %1131 = vmatpush1.msra.mxu0 0.0
    %1132 = vmatprep.subr.mxu0 0.0
    %1133 = vmatpush1.msra.mxu0 0.0
    %1134 = vmatprep.subr.mxu0 0.0
    %1135 = vmatpush1.msra.mxu0 0.0
    %1136 = vmatprep.subr.mxu0 0.0
    %1137 = vmatpush1.msra.mxu0 0.0
    %1138 = vmatprep.subr.mxu0 0.0
    %1139 = vmatpush1.msra.mxu0 0.0
    %1140 = vmatprep.subr.mxu0 0.0
    %1141 = vmatpush1.msra.mxu0 0.0
    %1142 = vmatprep.subr.mxu0 0.0
    %1143 = vmatpush1.msra.mxu0 0.0
    %1144 = vmatprep.subr.mxu0 0.0
    %1145 = vmatpush1.msra.mxu0 0.0
    %1146 = vmatprep.subr.mxu0 0.0
    %1147 = vmatpush1.msra.mxu0 %v879
    %1148 = vmatprep.subr.mxu0 0.0
    %1149 = vmatpush1.msra.mxu0 %v878
    %1150 = vmatprep.subr.mxu0 0.0
    %1151 = vmatpush2.msra.mxu0 0.0
    %1152 = vmatprep.subr.mxu0 0.0
    %1153 = vmatpush2.msra.mxu0 0.0
    %1154 = vmatprep.subr.mxu0 0.0
    %1155 = vmatpush2.msra.mxu0 0.0
    %1156 = vmatprep.subr.mxu0 0.0
    %1157 = vmatpush2.msra.mxu0 0.0
    %1158 = vmatprep.subr.mxu0 0.0
    %1159 = vmatpush2.msra.mxu0 0.0
    %1160 = vmatprep.subr.mxu0 0.0
    %1161 = vmatpush2.msra.mxu0 0.0
    %1162 = vmatprep.subr.mxu0 0.0
    %1163 = vmatpush2.msra.mxu0 0.0
    %1164 = vmatprep.subr.mxu0 0.0
    %1165 = vmatpush2.msra.mxu0 0.0
    %1166 = vmatprep.subr.mxu0 0.0
    %1167 = vmatpush2.msra.mxu0 0.0
    %1168 = vmatprep.subr.mxu0 0.0
    %1169 = vmatpush2.msra.mxu0 0.0
    %1170 = vmatprep.subr.mxu0 0.0
    %1171 = vmatpush2.msra.mxu0 0.0
    %1172 = vmatprep.subr.mxu0 0.0
    %1173 = vmatpush2.msra.mxu0 0.0
    %1174 = vmatprep.subr.mxu0 0.0
    %1175 = vmatpush2.msra.mxu0 0.0
    %1176 = vmatprep.subr.mxu0 0.0
    %1177 = vmatpush2.msra.mxu0 0.0
    %1178 = vmatprep.subr.mxu0 0.0
    %1179 = vmatpush2.msra.mxu0 0.0
    %1180 = vmatprep.subr.mxu0 0.0
    %1181 = vmatpush2.msra.mxu0 0.0
    %1182 = vmatprep.mubr.f32.mxu0 0.0
    %1183 = vmatmul.mubr.f32.gmra.mxu0 %v1116
    %v1184 = vpop.f32.mrf.mxu0
    %v1185 = vadd.f32 0.0, %v1184
    %v1186 = vpop.f32.mrf.mxu0
    %1187 = vdwg.mxu0
    %1188 = vrot.lane.b32.xlu0 %v253, 80
    %v1189 = vpop.permute.xlu0 %1188
    %v1191 = vmul.f32 %v1185, %v1189
    %v1192 = vadd.f32 %v1113, %v1191
    %v1193 = vld [vmem:[#allocation8] sm:$0xff]
    %v1194 = vld [vmem:[#allocation8 + $0x8] sm:$0xff]
    %v1195 = vld [vmem:[#allocation9] sm:$0x1]
    %v1197 = vlaneseq
    %v1198 = vshrl.u32 %v1197, 7
    %v1199 = vsub.s32 0, %v1198
    %v1200 = vrot.slane %v1195, %v1199
    %v1203 = vsel %vm268, %v1192, 0
    %v1206 = vsel %vm268, %v1193, 0
    %v1209 = vsel %vm268, %v1194, 0
    %1211 = vmatprep.subr.mxu0 0.0
    %1212 = vmatpush1.xpose.msra.mxu0 0.0
    %1213 = vmatprep.subr.mxu0 0.0
    %1214 = vmatpush1.xpose.msra.mxu0 0.0
    %1215 = vmatprep.subr.mxu0 0.0
    %1216 = vmatpush1.xpose.msra.mxu0 0.0
    %1217 = vmatprep.subr.mxu0 0.0
    %1218 = vmatpush1.xpose.msra.mxu0 0.0
    %1219 = vmatprep.subr.mxu0 0.0
    %1220 = vmatpush1.xpose.msra.mxu0 0.0
    %1221 = vmatprep.subr.mxu0 0.0
    %1222 = vmatpush1.xpose.msra.mxu0 0.0
    %1223 = vmatprep.subr.mxu0 0.0
    %1224 = vmatpush1.xpose.msra.mxu0 0.0
    %1225 = vmatprep.subr.mxu0 0.0
    %1226 = vmatpush1.xpose.msra.mxu0 0.0
    %1227 = vmatprep.subr.mxu0 0.0
    %1228 = vmatpush1.xpose.msra.mxu0 0.0
    %1229 = vmatprep.subr.mxu0 0.0
    %1230 = vmatpush1.xpose.msra.mxu0 0.0
    %1231 = vmatprep.subr.mxu0 0.0
    %1232 = vmatpush1.xpose.msra.mxu0 0.0
    %1233 = vmatprep.subr.mxu0 0.0
    %1234 = vmatpush1.xpose.msra.mxu0 0.0
    %1235 = vmatprep.subr.mxu0 0.0
    %1236 = vmatpush1.xpose.msra.mxu0 0.0
    %1237 = vmatprep.subr.mxu0 0.0
    %1238 = vmatpush1.xpose.msra.mxu0 0.0
    %1239 = vmatprep.subr.mxu0 0.0
    %1240 = vmatpush1.xpose.msra.mxu0 %v1209
    %1241 = vmatprep.subr.mxu0 0.0
    %1242 = vmatpush1.xpose.msra.mxu0 %v1206
    %1243 = vmatprep.subr.mxu0 0.0
    %1244 = vmatpush2.xpose.msra.mxu0 0.0
    %1245 = vmatprep.subr.mxu0 0.0
    %1246 = vmatpush2.xpose.msra.mxu0 0.0
    %1247 = vmatprep.subr.mxu0 0.0
    %1248 = vmatpush2.xpose.msra.mxu0 0.0
    %1249 = vmatprep.subr.mxu0 0.0
    %1250 = vmatpush2.xpose.msra.mxu0 0.0
    %1251 = vmatprep.subr.mxu0 0.0
    %1252 = vmatpush2.xpose.msra.mxu0 0.0
    %1253 = vmatprep.subr.mxu0 0.0
    %1254 = vmatpush2.xpose.msra.mxu0 0.0
    %1255 = vmatprep.subr.mxu0 0.0
    %1256 = vmatpush2.xpose.msra.mxu0 0.0
    %1257 = vmatprep.subr.mxu0 0.0
    %1258 = vmatpush2.xpose.msra.mxu0 0.0
    %1259 = vmatprep.subr.mxu0 0.0
    %1260 = vmatpush2.xpose.msra.mxu0 0.0
    %1261 = vmatprep.subr.mxu0 0.0
    %1262 = vmatpush2.xpose.msra.mxu0 0.0
    %1263 = vmatprep.subr.mxu0 0.0
    %1264 = vmatpush2.xpose.msra.mxu0 0.0
    %1265 = vmatprep.subr.mxu0 0.0
    %1266 = vmatpush2.xpose.msra.mxu0 0.0
    %1267 = vmatprep.subr.mxu0 0.0
    %1268 = vmatpush2.xpose.msra.mxu0 0.0
    %1269 = vmatprep.subr.mxu0 0.0
    %1270 = vmatpush2.xpose.msra.mxu0 0.0
    %1271 = vmatprep.subr.mxu0 0.0
    %1272 = vmatpush2.xpose.msra.mxu0 0.0
    %1273 = vmatprep.subr.mxu0 0.0
    %1274 = vmatpush2.xpose.msra.mxu0 0.0
    %1275 = vmatprep.mubr.f32.mxu0 0.0
    %1276 = vmatmul.mubr.f32.gmra.mxu0 %v1203
    %v1277 = vpop.f32.mrf.mxu0
    %v1278 = vadd.f32 %v1200, %v1277
    %v1279 = vpop.f32.mrf.mxu0
    %1280 = vdwg.mxu0
    %v1281 = vld [vmem:[%s9] sm:$0xff]
    %v1282 = vld [vmem:[%s9 + $0x8] sm:$0xff]
    %v1283 = vld [vmem:[%s9 + $0x10] sm:$0xff]
    %v1284 = vld [vmem:[%s9 + $0x18] sm:$0xff]
    %v1285 = vld [vmem:[%s10] sm:$0xff]
    %v1286 = vld [vmem:[%s10 + $0x8] sm:$0xff]
    %v1287 = vld [vmem:[%s10 + $0x10] sm:$0xff]
    %v1288 = vld [vmem:[%s10 + $0x18] sm:$0xff]
    %v1290 = vsel %vm268, %v1278, 0
    %v1293 = vsel %vm268, %v1285, 0
    %v1296 = vsel %vm268, %v1286, 0
    %v1299 = vsel %vm268, %v1287, 0
    %v1302 = vsel %vm268, %v1288, 0
    %1304 = vmatprep.subr.mxu0 0.0
    %1305 = vmatpush1.xpose.msra.mxu0 0.0
    %1306 = vmatprep.subr.mxu0 0.0
    %1307 = vmatpush1.xpose.msra.mxu0 0.0
    %1308 = vmatprep.subr.mxu0 0.0
    %1309 = vmatpush1.xpose.msra.mxu0 0.0
    %1310 = vmatprep.subr.mxu0 0.0
    %1311 = vmatpush1.xpose.msra.mxu0 0.0
    %1312 = vmatprep.subr.mxu0 0.0
    %1313 = vmatpush1.xpose.msra.mxu0 0.0
    %1314 = vmatprep.subr.mxu0 0.0
    %1315 = vmatpush1.xpose.msra.mxu0 0.0
    %1316 = vmatprep.subr.mxu0 0.0
    %1317 = vmatpush1.xpose.msra.mxu0 0.0
    %1318 = vmatprep.subr.mxu0 0.0
    %1319 = vmatpush1.xpose.msra.mxu0 0.0
    %1320 = vmatprep.subr.mxu0 0.0
    %1321 = vmatpush1.xpose.msra.mxu0 0.0
    %1322 = vmatprep.subr.mxu0 0.0
    %1323 = vmatpush1.xpose.msra.mxu0 0.0
    %1324 = vmatprep.subr.mxu0 0.0
    %1325 = vmatpush1.xpose.msra.mxu0 0.0
    %1326 = vmatprep.subr.mxu0 0.0
    %1327 = vmatpush1.xpose.msra.mxu0 0.0
    %1328 = vmatprep.subr.mxu0 0.0
    %1329 = vmatpush1.xpose.msra.mxu0 %v1302
    %1330 = vmatprep.subr.mxu0 0.0
    %1331 = vmatpush1.xpose.msra.mxu0 %v1299
    %1332 = vmatprep.subr.mxu0 0.0
    %1333 = vmatpush1.xpose.msra.mxu0 %v1296
    %1334 = vmatprep.subr.mxu0 0.0
    %1335 = vmatpush1.xpose.msra.mxu0 %v1293
    %1336 = vmatprep.subr.mxu0 0.0
    %1337 = vmatpush2.xpose.msra.mxu0 0.0
    %1338 = vmatprep.subr.mxu0 0.0
    %1339 = vmatpush2.xpose.msra.mxu0 0.0
    %1340 = vmatprep.subr.mxu0 0.0
    %1341 = vmatpush2.xpose.msra.mxu0 0.0
    %1342 = vmatprep.subr.mxu0 0.0
    %1343 = vmatpush2.xpose.msra.mxu0 0.0
    %1344 = vmatprep.subr.mxu0 0.0
    %1345 = vmatpush2.xpose.msra.mxu0 0.0
    %1346 = vmatprep.subr.mxu0 0.0
    %1347 = vmatpush2.xpose.msra.mxu0 0.0
    %1348 = vmatprep.subr.mxu0 0.0
    %1349 = vmatpush2.xpose.msra.mxu0 0.0
    %1350 = vmatprep.subr.mxu0 0.0
    %1351 = vmatpush2.xpose.msra.mxu0 0.0
    %1352 = vmatprep.subr.mxu0 0.0
    %1353 = vmatpush2.xpose.msra.mxu0 0.0
    %1354 = vmatprep.subr.mxu0 0.0
    %1355 = vmatpush2.xpose.msra.mxu0 0.0
    %1356 = vmatprep.subr.mxu0 0.0
    %1357 = vmatpush2.xpose.msra.mxu0 0.0
    %1358 = vmatprep.subr.mxu0 0.0
    %1359 = vmatpush2.xpose.msra.mxu0 0.0
    %1360 = vmatprep.subr.mxu0 0.0
    %1361 = vmatpush2.xpose.msra.mxu0 0.0
    %1362 = vmatprep.subr.mxu0 0.0
    %1363 = vmatpush2.xpose.msra.mxu0 0.0
    %1364 = vmatprep.subr.mxu0 0.0
    %1365 = vmatpush2.xpose.msra.mxu0 0.0
    %1366 = vmatprep.subr.mxu0 0.0
    %1367 = vmatpush2.xpose.msra.mxu0 0.0
    %1368 = vmatprep.mubr.f32.mxu0 0.0
    %1369 = vmatmul.mubr.f32.gmra.mxu0 %v1290
    %v1370 = vpop.f32.mrf.mxu0
    %v1371 = vadd.f32 0.0, %v1370
    %v1372 = vpop.f32.mrf.mxu0
    %1373 = vdwg.mxu0
    %v1375 = vsel %vm268, %v151, 0
    %v1378 = vsel %vm268, %v1281, 0
    %v1381 = vsel %vm268, %v1282, 0
    %v1384 = vsel %vm268, %v1283, 0
    %v1387 = vsel %vm268, %v1284, 0
    %1389 = vmatprep.subr.mxu0 0.0
    %1390 = vmatpush1.xpose.msra.mxu0 0.0
    %1391 = vmatprep.subr.mxu0 0.0
    %1392 = vmatpush1.xpose.msra.mxu0 0.0
    %1393 = vmatprep.subr.mxu0 0.0
    %1394 = vmatpush1.xpose.msra.mxu0 0.0
    %1395 = vmatprep.subr.mxu0 0.0
    %1396 = vmatpush1.xpose.msra.mxu0 0.0
    %1397 = vmatprep.subr.mxu0 0.0
    %1398 = vmatpush1.xpose.msra.mxu0 0.0
    %1399 = vmatprep.subr.mxu0 0.0
    %1400 = vmatpush1.xpose.msra.mxu0 0.0
    %1401 = vmatprep.subr.mxu0 0.0
    %1402 = vmatpush1.xpose.msra.mxu0 0.0
    %1403 = vmatprep.subr.mxu0 0.0
    %1404 = vmatpush1.xpose.msra.mxu0 0.0
    %1405 = vmatprep.subr.mxu0 0.0
    %1406 = vmatpush1.xpose.msra.mxu0 0.0
    %1407 = vmatprep.subr.mxu0 0.0
    %1408 = vmatpush1.xpose.msra.mxu0 0.0
    %1409 = vmatprep.subr.mxu0 0.0
    %1410 = vmatpush1.xpose.msra.mxu0 0.0
    %1411 = vmatprep.subr.mxu0 0.0
    %1412 = vmatpush1.xpose.msra.mxu0 0.0
    %1413 = vmatprep.subr.mxu0 0.0
    %1414 = vmatpush1.xpose.msra.mxu0 %v1387
    %1415 = vmatprep.subr.mxu0 0.0
    %1416 = vmatpush1.xpose.msra.mxu0 %v1384
    %1417 = vmatprep.subr.mxu0 0.0
    %1418 = vmatpush1.xpose.msra.mxu0 %v1381
    %1419 = vmatprep.subr.mxu0 0.0
    %1420 = vmatpush1.xpose.msra.mxu0 %v1378
    %1421 = vmatprep.subr.mxu0 0.0
    %1422 = vmatpush2.xpose.msra.mxu0 0.0
    %1423 = vmatprep.subr.mxu0 0.0
    %1424 = vmatpush2.xpose.msra.mxu0 0.0
    %1425 = vmatprep.subr.mxu0 0.0
    %1426 = vmatpush2.xpose.msra.mxu0 0.0
    %1427 = vmatprep.subr.mxu0 0.0
    %1428 = vmatpush2.xpose.msra.mxu0 0.0
    %1429 = vmatprep.subr.mxu0 0.0
    %1430 = vmatpush2.xpose.msra.mxu0 0.0
    %1431 = vmatprep.subr.mxu0 0.0
    %1432 = vmatpush2.xpose.msra.mxu0 0.0
    %1433 = vmatprep.subr.mxu0 0.0
    %1434 = vmatpush2.xpose.msra.mxu0 0.0
    %1435 = vmatprep.subr.mxu0 0.0
    %1436 = vmatpush2.xpose.msra.mxu0 0.0
    %1437 = vmatprep.subr.mxu0 0.0
    %1438 = vmatpush2.xpose.msra.mxu0 0.0
    %1439 = vmatprep.subr.mxu0 0.0
    %1440 = vmatpush2.xpose.msra.mxu0 0.0
    %1441 = vmatprep.subr.mxu0 0.0
    %1442 = vmatpush2.xpose.msra.mxu0 0.0
    %1443 = vmatprep.subr.mxu0 0.0
    %1444 = vmatpush2.xpose.msra.mxu0 0.0
    %1445 = vmatprep.subr.mxu0 0.0
    %1446 = vmatpush2.xpose.msra.mxu0 0.0
    %1447 = vmatprep.subr.mxu0 0.0
    %1448 = vmatpush2.xpose.msra.mxu0 0.0
    %1449 = vmatprep.subr.mxu0 0.0
    %1450 = vmatpush2.xpose.msra.mxu0 0.0
    %1451 = vmatprep.subr.mxu0 0.0
    %1452 = vmatpush2.xpose.msra.mxu0 0.0
    %1453 = vmatprep.mubr.f32.mxu0 0.0
    %1454 = vmatmul.mubr.f32.gmra.mxu0 %v1375
    %v1455 = vpop.f32.mrf.mxu0
    %v1456 = vadd.f32 %v1371, %v1455
    %v1457 = vpop.f32.mrf.mxu0
    %1458 = vdwg.mxu0
    %v1459 = vld [vmem:[#allocation11] sm:$0x1]
    %v1461 = vlaneseq
    %v1462 = vshrl.u32 %v1461, 7
    %v1463 = vsub.s32 0, %v1462
    %v1464 = vrot.slane %v1459, %v1463
    %v1466 = vadd.f32 %v1456, %v1464
    %v1467 = vmax.f32 %v1466, 0.0
    %v1468 = vld [vmem:[%s12] sm:$0xff]
    %v1469 = vld [vmem:[%s12 + $0x8] sm:$0xff]
    %v1470 = vld [vmem:[%s13] sm:$0x1]
    %v1472 = vlaneseq
    %v1473 = vshrl.u32 %v1472, 7
    %v1474 = vsub.s32 0, %v1473
    %v1475 = vrot.slane %v1470, %v1474
    %vm1477 = vcmask 261120
    %v1479 = vsel %vm1477, %v1467, 0
    %v1482 = vsel %vm1477, %v1468, 0
    %v1485 = vsel %vm1477, %v1469, 0
    %1487 = vmatprep.subr.mxu0 0.0
    %1488 = vmatpush1.xpose.msra.mxu0 0.0
    %1489 = vmatprep.subr.mxu0 0.0
    %1490 = vmatpush1.xpose.msra.mxu0 0.0
    %1491 = vmatprep.subr.mxu0 0.0
    %1492 = vmatpush1.xpose.msra.mxu0 0.0
    %1493 = vmatprep.subr.mxu0 0.0
    %1494 = vmatpush1.xpose.msra.mxu0 0.0
    %1495 = vmatprep.subr.mxu0 0.0
    %1496 = vmatpush1.xpose.msra.mxu0 0.0
    %1497 = vmatprep.subr.mxu0 0.0
    %1498 = vmatpush1.xpose.msra.mxu0 0.0
    %1499 = vmatprep.subr.mxu0 0.0
    %1500 = vmatpush1.xpose.msra.mxu0 0.0
    %1501 = vmatprep.subr.mxu0 0.0
    %1502 = vmatpush1.xpose.msra.mxu0 0.0
    %1503 = vmatprep.subr.mxu0 0.0
    %1504 = vmatpush1.xpose.msra.mxu0 0.0
    %1505 = vmatprep.subr.mxu0 0.0
    %1506 = vmatpush1.xpose.msra.mxu0 0.0
    %1507 = vmatprep.subr.mxu0 0.0
    %1508 = vmatpush1.xpose.msra.mxu0 0.0
    %1509 = vmatprep.subr.mxu0 0.0
    %1510 = vmatpush1.xpose.msra.mxu0 0.0
    %1511 = vmatprep.subr.mxu0 0.0
    %1512 = vmatpush1.xpose.msra.mxu0 0.0
    %1513 = vmatprep.subr.mxu0 0.0
    %1514 = vmatpush1.xpose.msra.mxu0 0.0
    %1515 = vmatprep.subr.mxu0 0.0
    %1516 = vmatpush1.xpose.msra.mxu0 %v1485
    %1517 = vmatprep.subr.mxu0 0.0
    %1518 = vmatpush1.xpose.msra.mxu0 %v1482
    %1519 = vmatprep.subr.mxu0 0.0
    %1520 = vmatpush2.xpose.msra.mxu0 0.0
    %1521 = vmatprep.subr.mxu0 0.0
    %1522 = vmatpush2.xpose.msra.mxu0 0.0
    %1523 = vmatprep.subr.mxu0 0.0
    %1524 = vmatpush2.xpose.msra.mxu0 0.0
    %1525 = vmatprep.subr.mxu0 0.0
    %1526 = vmatpush2.xpose.msra.mxu0 0.0
    %1527 = vmatprep.subr.mxu0 0.0
    %1528 = vmatpush2.xpose.msra.mxu0 0.0
    %1529 = vmatprep.subr.mxu0 0.0
    %1530 = vmatpush2.xpose.msra.mxu0 0.0
    %1531 = vmatprep.subr.mxu0 0.0
    %1532 = vmatpush2.xpose.msra.mxu0 0.0
    %1533 = vmatprep.subr.mxu0 0.0
    %1534 = vmatpush2.xpose.msra.mxu0 0.0
    %1535 = vmatprep.subr.mxu0 0.0
    %1536 = vmatpush2.xpose.msra.mxu0 0.0
    %1537 = vmatprep.subr.mxu0 0.0
    %1538 = vmatpush2.xpose.msra.mxu0 0.0
    %1539 = vmatprep.subr.mxu0 0.0
    %1540 = vmatpush2.xpose.msra.mxu0 0.0
    %1541 = vmatprep.subr.mxu0 0.0
    %1542 = vmatpush2.xpose.msra.mxu0 0.0
    %1543 = vmatprep.subr.mxu0 0.0
    %1544 = vmatpush2.xpose.msra.mxu0 0.0
    %1545 = vmatprep.subr.mxu0 0.0
    %1546 = vmatpush2.xpose.msra.mxu0 0.0
    %1547 = vmatprep.subr.mxu0 0.0
    %1548 = vmatpush2.xpose.msra.mxu0 0.0
    %1549 = vmatprep.subr.mxu0 0.0
    %1550 = vmatpush2.xpose.msra.mxu0 0.0
    %1551 = vmatprep.mubr.f32.mxu0 0.0
    %1552 = vmatmul.mubr.f32.gmra.mxu0 %v1479
    %v1553 = vpop.f32.mrf.mxu0
    %v1554 = vadd.f32 %v1475, %v1553
    %v1555 = vpop.f32.mrf.mxu0
    %1556 = vdwg.mxu0
    %s1557 = sld [smem:[#allocation2]]
    %v1558 = vstv %s1557
    %v1559 = vmul.f32 %v1558, %v1554
    %v1560 = vadd.f32 %v151, %v1559
    %1561 = vst.msk [vmem:[#allocation12] sm:$0xff] %vm268, %v1560
    // Predicated region
    $region82: #{tpu_custom_call.1} parent=1 // pred_check
      _
    $region83: #{tpu_custom_call.1} parent=1 // pred_check_branch
      %1563 = sbr.rel (0) target = $region85
    $region84: #{tpu_custom_call.1} parent=1 // pred_region
      %s1565 = ssub.s32 128, 128
      %1566 = vsyncadd [#allocation5], %s1565
      %s1568 = sshll.u32 [#allocation12], 4
      %s1569 = int_to_ptr.vmem [resolvable:$true] %s1568
      %1571 = dma.vmem_to_hbm [thread:$0]  %s1569, 128, %s15, [#allocation5]
    $region85: #{tpu_custom_call.1} parent=1 // pred_fallthru
      _
    // Predicated region
    $region86: #{tpu_custom_call.1} parent=1 // pred_check
      _
    $region87: #{tpu_custom_call.1} parent=1 // pred_check_branch
      %1573 = sbr.rel (0) target = $region89
    $region88: #{tpu_custom_call.1} parent=1 // pred_region
      %1574 = dma.done [#allocation5], 128
    $region89: #{tpu_custom_call.1} parent=1 // pred_fallthru
      _
    %1575 = vsyncpa [#allocation4], 1
    %1576 = vsyncpa [#allocation7], 1
    %1577 = vsyncpa [#allocation10], 1
    %1578 = vsyncpa [#allocation5], 1

</llo_original>
